<compile_context>
chip_gen: v7x
topology: tpu7x:2x2x1
jax: 0.10.0
libtpu: 0.0.40
codegen_flags: <defaults>
</compile_context>

<pallas_src>
import functools

import jax
import jax.numpy as jnp
from jax.experimental import pallas as pl
from jax.experimental.pallas import tpu as pltpu


def _round_up(v, m):
    return ((v + m - 1) // m) * m


def _vmem_usable_bytes():
    """Per-TensorCore VMEM budget with headroom for Mosaic internal scratch."""
    try:
        cap = int(pltpu.get_tpu_info().vmem_capacity_bytes)  # 64 MiB (v7x) / 128 MiB (v5e, v6e)
    except Exception:
        cap = 64 << 20                                       # conservative: v7x per-TC
    return max(min(cap - (8 << 20), 100 << 20), 16 << 20)


# ------------- resident-feature kernels (grid = (N_pad // TM,), feature slab stays in VMEM) -----

def _gin_fused_resident_kernel(eps, a_ref, x_ref, feat_ref, w_ref, b_ref, o_ref):
    # agg = A @ x   (bf16 MXU operands, f32 accumulate); self term added exactly in f32.
    agg = jnp.dot(a_ref[...], feat_ref[...], preferred_element_type=jnp.float32)
    agg = agg + (1.0 + eps) * x_ref[...]
    # Fused Linear + ReLU epilogue, bf16 MXU.
    h = jnp.dot(agg.astype(jnp.bfloat16), w_ref[...], preferred_element_type=jnp.float32)
    o_ref[...] = jnp.maximum(h + b_ref[...], 0.0)


def _gin_agg_resident_kernel(eps, a_ref, y_ref, yfull_ref, b_ref, o_ref):
    # Features pre-projected (y = x @ W): (A x) W == A (x W); bias/ReLU after aggregation.
    agg = jnp.dot(a_ref[...], yfull_ref[...], preferred_element_type=jnp.float32)
    agg = agg + (1.0 + eps) * y_ref[...]
    o_ref[...] = jnp.maximum(agg + b_ref[...], 0.0)


# ------------- tiled-reduction fallback (grid = (N_pad // TM, N_pad // TK)) ---------------------

def _gin_fused_tiled_kernel(eps, a_ref, x_ref, feat_ref, w_ref, b_ref, o_ref, acc_ref):
    k = pl.program_id(1)

    @pl.when(k == 0)
    def _init():
        acc_ref[...] = (1.0 + eps) * x_ref[...]

    acc_ref[...] += jnp.dot(a_ref[...], feat_ref[...], preferred_element_type=jnp.float32)

    @pl.when(k == pl.num_programs(1) - 1)
    def _epilogue():
        h = jnp.dot(acc_ref[...].astype(jnp.bfloat16), w_ref[...],
                    preferred_element_type=jnp.float32)
        o_ref[...] = jnp.maximum(h + b_ref[...], 0.0)


def _gin_agg_tiled_kernel(eps, a_ref, y_ref, yk_ref, b_ref, o_ref):
    k = pl.program_id(1)

    @pl.when(k == 0)
    def _init():
        o_ref[...] = (1.0 + eps) * y_ref[...]

    # Output block is resident across k (o_spec ignores k) -> accumulate in place, no scratch.
    o_ref[...] += jnp.dot(a_ref[...], yk_ref[...], preferred_element_type=jnp.float32)

    @pl.when(k == pl.num_programs(1) - 1)
    def _epilogue():
        o_ref[...] = jnp.maximum(o_ref[...] + b_ref[...], 0.0)


# ------------------------------------------------------------------------------------------------

@functools.partial(jax.jit, static_argnames=("eps",))
def gin_conv(x, edge_index, weight, bias, eps=0.0):
    """GINConv forward. x: [N, F] f32, edge_index: [2, E] i32, weight: [F, H], bias: [H]."""
    if x.ndim == 1:
        x = x[:, None]
    N, F = x.shape
    H = weight.shape[1]
    eps = float(eps)

    F_pad = _round_up(F, 128)
    H_pad = _round_up(H, 128)
    N_pad = _round_up(N, 256)   # 256-multiple: MXU-shaped tiles on v6e/v7x, lane-dense A rows

    # ---- glue (same jit as the kernel): self-loop removal + dense bf16 adjacency counts -------
    row, col = edge_index[0], edge_index[1]
    ones = jnp.where(row != col, 1.0, 0.0).astype(jnp.bfloat16)
    adj = jnp.zeros((N_pad, N_pad), jnp.bfloat16).at[row, col].add(ones)
    # bf16 counts are exact for edge multiplicities <= 256; (1+eps)*x is added in f32 in-kernel,
    # so no eps rounding in the adjacency.

    xf = x.astype(jnp.float32)
    b2 = jnp.zeros((1, H_pad), jnp.float32).at[0, :H].set(bias.astype(jnp.float32))

    # Aggregate in whichever feature space is narrower after padding:
    #   F_pad <= H_pad : stream x, fuse @W + bias + ReLU into the kernel epilogue.
    #   H_pad <  F_pad : pre-project y = x @ W in f32, aggregate y, only +bias/ReLU in kernel.
    fuse_projection = F_pad <= H_pad
    if fuse_projection:
        self_f32 = jnp.zeros((N_pad, F_pad), jnp.float32).at[:N, :F].set(xf)
        feat_dim = F_pad
        w_pad = jnp.zeros((F_pad, H_pad), jnp.bfloat16).at[:F, :H].set(
            weight.astype(jnp.bfloat16))
    else:
        y = xf @ weight.astype(jnp.float32)
        self_f32 = jnp.zeros((N_pad, H_pad), jnp.float32).at[:N, :H].set(y)
        feat_dim = H_pad
        w_pad = None
    feat_bf16 = self_f32.astype(jnp.bfloat16)

    usable = _vmem_usable_bytes()

    def _resident_bytes(tm):
        b = (2 * tm * N_pad * 2            # A row tile (bf16, double-buffered)
             + 2 * tm * feat_dim * 4       # f32 self-term tile
             + 2 * N_pad * feat_dim * 2    # resident feature slab (counted double-buffered)
             + 2 * tm * H_pad * 4          # output tile
             + 2 * H_pad * 4)              # bias
        if fuse_projection:
            b += 2 * F_pad * H_pad * 2     # bf16 W
        return b

    tm_candidates = [t for t in (512, 384, 256, 128) if N_pad % t == 0]
    TM = next((t for t in tm_candidates if _resident_bytes(t) + (4 << 20) <= usable), None)
    use_resident = TM is not None
    out_shape = jax.ShapeDtypeStruct((N_pad, H_pad), jnp.float32)

    if use_resident:
        grid = (N_pad // TM,)
        a_spec = pl.BlockSpec((TM, N_pad), lambda i: (i, 0))
        self_spec = pl.BlockSpec((TM, feat_dim), lambda i: (i, 0))
        feat_spec = pl.BlockSpec((N_pad, feat_dim), lambda i: (0, 0))   # resident slab
        b_spec = pl.BlockSpec((1, H_pad), lambda i: (0, 0))
        o_spec = pl.BlockSpec((TM, H_pad), lambda i: (i, 0))
        params = pltpu.CompilerParams(
            dimension_semantics=("parallel",),
            vmem_limit_bytes=int(min(max(_resident_bytes(TM) + (8 << 20), 32 << 20), usable)),
        )
        if fuse_projection:
            w_spec = pl.BlockSpec((F_pad, H_pad), lambda i: (0, 0))
            out = pl.pallas_call(
                functools.partial(_gin_fused_resident_kernel, eps),
                out_shape=out_shape,
                grid_spec=pltpu.PrefetchScalarGridSpec(
                    num_scalar_prefetch=0, grid=grid,
                    in_specs=[a_spec, self_spec, feat_spec, w_spec, b_spec],
                    out_specs=o_spec),
                compiler_params=params,
            )(adj, self_f32, feat_bf16, w_pad, b2)
        else:
            out = pl.pallas_call(
                functools.partial(_gin_agg_resident_kernel, eps),
                out_shape=out_shape,
                grid_spec=pltpu.PrefetchScalarGridSpec(
                    num_scalar_prefetch=0, grid=grid,
                    in_specs=[a_spec, self_spec, feat_spec, b_spec],
                    out_specs=o_spec),
                compiler_params=params,
            )(adj, self_f32, feat_bf16, b2)
    else:
        # Feature slab does not fit VMEM: stream it over a reduction grid axis.
        TM = next(t for t in (256, 128) if N_pad % t == 0)

        def _tiled_bytes(tm, tk):
            b = (2 * tm * tk * 2 + 2 * tm * feat_dim * 4 + 2 * tk * feat_dim * 2
                 + 2 * tm * H_pad * 4 + 2 * H_pad * 4)
            if fuse_projection:
                b += 2 * F_pad * H_pad * 2 + tm * F_pad * 4
            return b

        TK = next((t for t in (2048, 1024, 512, 256)
                   if N_pad % t == 0 and _tiled_bytes(TM, t) + (4 << 20) <= usable), 256)
        grid = (N_pad // TM, N_pad // TK)
        a_spec = pl.BlockSpec((TM, TK), lambda i, k: (i, k))
        self_spec = pl.BlockSpec((TM, feat_dim), lambda i, k: (i, 0))
        feat_spec = pl.BlockSpec((TK, feat_dim), lambda i, k: (k, 0))
        b_spec = pl.BlockSpec((1, H_pad), lambda i, k: (0, 0))
        o_spec = pl.BlockSpec((TM, H_pad), lambda i, k: (i, 0))
        params = pltpu.CompilerParams(
            dimension_semantics=("parallel", "arbitrary"),
            vmem_limit_bytes=int(min(max(_tiled_bytes(TM, TK) + (8 << 20), 32 << 20), usable)),
        )
        if fuse_projection:
            w_spec = pl.BlockSpec((F_pad, H_pad), lambda i, k: (0, 0))
            out = pl.pallas_call(
                functools.partial(_gin_fused_tiled_kernel, eps),
                out_shape=out_shape,
                grid_spec=pltpu.PrefetchScalarGridSpec(
                    num_scalar_prefetch=0, grid=grid,
                    in_specs=[a_spec, self_spec, feat_spec, w_spec, b_spec],
                    out_specs=o_spec,
                    scratch_shapes=[pltpu.VMEM((TM, F_pad), jnp.float32)]),
                compiler_params=params,
            )(adj, self_f32, feat_bf16, w_pad, b2)
        else:
            out = pl.pallas_call(
                functools.partial(_gin_agg_tiled_kernel, eps),
                out_shape=out_shape,
                grid_spec=pltpu.PrefetchScalarGridSpec(
                    num_scalar_prefetch=0, grid=grid,
                    in_specs=[a_spec, self_spec, feat_spec, b_spec],
                    out_specs=o_spec),
                compiler_params=params,
            )(adj, self_f32, feat_bf16, b2)

    return out[:N, :H]


def reference(x, edge_index, weight, bias, eps=0.0):
    """Pure-JAX f32 reference mirroring the PyTorch forward."""
    row, col = edge_index[0], edge_index[1]
    keep = row != col
    gathered = jnp.where(keep[:, None], x[col], 0.0)
    agg = jnp.zeros_like(x).at[row].add(gathered)
    out = (1.0 + eps) * x + agg
    out = out @ weight + bias
    return jnp.maximum(out, 0.0)


if __name__ == "__main__":
    key = jax.random.PRNGKey(0)
    k_x, k_e, k_w, k_b = jax.random.split(key, 4)

    # nodes, in-features, hidden, edges (small, but exercises the full tiling logic)
    N, F, H, E = 600, 16, 32, 2400
    eps = 0.1

    x = jax.random.normal(k_x, (N, F), dtype=jnp.float32)
    edge_index = jax.random.randint(k_e, (2, E), 0, N, dtype=jnp.int32)

    # Deterministic Linear(F, H) init (Kaiming-uniform-ish bound, like nn.Linear)
    bound = 1.0 / (F ** 0.5)
    weight = jax.random.uniform(k_w, (F, H), jnp.float32, -bound, bound)
    bias = jax.random.uniform(k_b, (H,), jnp.float32, -bound, bound)

    out = gin_conv(x, edge_index, weight, bias, eps=eps)
    out = jax.block_until_ready(out)
    assert out.shape == (N, H)

    ref = reference(x, edge_index, weight, bias, eps)
    # bf16 aggregation / projection operands (f32 accumulate, exact f32 self term) ->
    # relaxed tolerance vs the f32 reference.
    assert jnp.allclose(out, ref, atol=3e-2, rtol=3e-2), "mismatch vs reference"

    print("KERNEL_OK")
</pallas_src>

<mosaic_0001>
module attributes {stable_mosaic.version = 11 : i64} {
  func.func @_gin_fused_resident_kernel(%arg0: i32, %arg1: memref<384x768xbf16, #tpu.memory_space<vmem>>, %arg2: memref<384x128xf32, #tpu.memory_space<vmem>>, %arg3: memref<768x128xbf16, #tpu.memory_space<vmem>>, %arg4: memref<128x128xbf16, #tpu.memory_space<vmem>>, %arg5: memref<1x128xf32, #tpu.memory_space<vmem>>, %arg6: memref<384x128xf32, #tpu.memory_space<vmem>>) attributes {dimension_semantics = [#tpu.dimension_semantics<parallel>], iteration_bounds = array<i64: 2>, scalar_prefetch = 0 : i64, scratch_operands = 0 : i64, tpu.core_type = #tpu.core_type<tc>, window_params = [{transform_indices = @transform_0, window_bounds = array<i64: 384, 768>}, {transform_indices = @transform_1, window_bounds = array<i64: 384, 128>}, {pipeline_mode = #tpu.pipeline_mode<synchronous>, transform_indices = @transform_2, window_bounds = array<i64: 768, 128>}, {pipeline_mode = #tpu.pipeline_mode<synchronous>, transform_indices = @transform_3, window_bounds = array<i64: 128, 128>}, {pipeline_mode = #tpu.pipeline_mode<synchronous>, transform_indices = @transform_4, window_bounds = array<i64: 1, 128>}, {transform_indices = @transform_5, window_bounds = array<i64: 384, 128>}]} {
    %c0 = arith.constant 0 : index
    %c0_0 = arith.constant 0 : index
    %0 = vector.load %arg1[%c0, %c0_0] : memref<384x768xbf16, #tpu.memory_space<vmem>>, vector<384x768xbf16>
    %c0_1 = arith.constant 0 : index
    %c0_2 = arith.constant 0 : index
    %1 = vector.load %arg3[%c0_1, %c0_2] : memref<768x128xbf16, #tpu.memory_space<vmem>>, vector<768x128xbf16>
    %cst = arith.constant dense<0.000000e+00> : vector<384x128xf32>
    %2 = tpu.matmul %0, %1, %cst {dimension_numbers = #tpu.dot_dimension_numbers<[1], [0], [0], [1], [0, 0, 1, 1], [], []>} : vector<384x768xbf16>, vector<768x128xbf16>, vector<384x128xf32> -> vector<384x128xf32>
    %c0_3 = arith.constant 0 : index
    %c0_4 = arith.constant 0 : index
    %3 = vector.load %arg2[%c0_3, %c0_4] : memref<384x128xf32, #tpu.memory_space<vmem>>, vector<384x128xf32>
    %cst_5 = arith.constant 1.100000e+00 : f32
    %4 = vector.broadcast %cst_5 : f32 to vector<384x128xf32>
    %5 = arith.mulf %4, %3 : vector<384x128xf32>
    %6 = arith.addf %2, %5 : vector<384x128xf32>
    %7 = arith.truncf %6 : vector<384x128xf32> to vector<384x128xbf16>
    %c0_6 = arith.constant 0 : index
    %c0_7 = arith.constant 0 : index
    %8 = vector.load %arg4[%c0_6, %c0_7] : memref<128x128xbf16, #tpu.memory_space<vmem>>, vector<128x128xbf16>
    %cst_8 = arith.constant dense<0.000000e+00> : vector<384x128xf32>
    %9 = tpu.matmul %7, %8, %cst_8 {dimension_numbers = #tpu.dot_dimension_numbers<[1], [0], [0], [1], [0, 0, 1, 1], [], []>} : vector<384x128xbf16>, vector<128x128xbf16>, vector<384x128xf32> -> vector<384x128xf32>
    %c0_9 = arith.constant 0 : index
    %c0_10 = arith.constant 0 : index
    %10 = vector.load %arg5[%c0_9, %c0_10] : memref<1x128xf32, #tpu.memory_space<vmem>>, vector<1x128xf32>
    %11 = vector.broadcast %10 : vector<1x128xf32> to vector<384x128xf32>
    %12 = arith.addf %9, %11 : vector<384x128xf32>
    %cst_11 = arith.constant 0.000000e+00 : f32
    %13 = vector.broadcast %cst_11 : f32 to vector<384x128xf32>
    %14 = arith.maximumf %12, %13 : vector<384x128xf32>
    %c0_12 = arith.constant 0 : index
    %c0_13 = arith.constant 0 : index
    %15 = vector.load %arg6[%c0_12, %c0_13] : memref<384x128xf32, #tpu.memory_space<vmem>>, vector<384x128xf32>
    tpu.vector_store %arg6[%c0_12, %c0_13], %14 {strides = array<i32>} : memref<384x128xf32, #tpu.memory_space<vmem>>, vector<384x128xf32>,
    return
  }
  func.func @transform_0(%arg0: i32) -> (i32, i32) {
    %c0_i32 = arith.constant 0 : i32
    %c0_i32_0 = arith.constant 0 : i32
    return %arg0, %c0_i32 : i32, i32
  }
  func.func @transform_1(%arg0: i32) -> (i32, i32) {
    %c0_i32 = arith.constant 0 : i32
    %c0_i32_0 = arith.constant 0 : i32
    return %arg0, %c0_i32 : i32, i32
  }
  func.func @transform_2(%arg0: i32) -> (i32, i32) {
    %c0_i32 = arith.constant 0 : i32
    %c0_i32_0 = arith.constant 0 : i32
    %c0_i32_1 = arith.constant 0 : i32
    return %c0_i32, %c0_i32_0 : i32, i32
  }
  func.func @transform_3(%arg0: i32) -> (i32, i32) {
    %c0_i32 = arith.constant 0 : i32
    %c0_i32_0 = arith.constant 0 : i32
    %c0_i32_1 = arith.constant 0 : i32
    return %c0_i32, %c0_i32_0 : i32, i32
  }
  func.func @transform_4(%arg0: i32) -> (i32, i32) {
    %c0_i32 = arith.constant 0 : i32
    %c0_i32_0 = arith.constant 0 : i32
    %c0_i32_1 = arith.constant 0 : i32
    return %c0_i32, %c0_i32_0 : i32, i32
  }
  func.func @transform_5(%arg0: i32) -> (i32, i32) {
    %c0_i32 = arith.constant 0 : i32
    %c0_i32_0 = arith.constant 0 : i32
    return %arg0, %c0_i32 : i32, i32
  }
}

</mosaic_0001>

<llo_original>
// kernel: gin_conv.1
$region0: #{gin_conv.1}
  #allocation0 [shape = 'u32[]', space=smem, size = 0x4, offset = 0x4, fixed_abs, tag = 'smem constant byte address 0x4 - core index']
  #allocation1 [shape = 'u32[144,128]{1,0:T(1,128)}', space=vmem, size = 0x12000, scoped, tag = 'internal scratch']
  %s0 = inlined_call_operand.vmem [shape: bf16[768,768], index: 0, kind: input, shape index: {}]
  %s1 = inlined_call_operand.vmem [shape: f32[768,128], index: 1, kind: input, shape index: {}]
  %s2 = inlined_call_operand.vmem [shape: bf16[768,128], index: 2, kind: input, shape index: {}]
  %s3 = inlined_call_operand.vmem [shape: bf16[128,128], index: 3, kind: input, shape index: {}]
  %s4 = inlined_call_operand.vmem [shape: f32[1,128], index: 4, kind: input, shape index: {}]
  %s5 = inlined_call_operand.vmem [shape: f32[768,128], index: 5, kind: output, shape index: {}]
  %s6 = sld [smem:[#allocation0]]
  $region53: #{gin_conv.1} parent=0
    _
  %s8 = ssub.s32 1, %s6
  %s9 = scalar_select 0, %s8, %s6
  loop: start=0, step=1, limit=4
  $region2: #{gin_conv.1} parent=0 // loop_pre_header
    _
  $region3: #{gin_conv.1} parent=0 // loop_header
    %s11 = sphi 0, %s15
    %p12 = scmp.ge.s32.totalorder %s11, 4
    %s21 = sphi 0, %s23
    %s24 = sphi 0, %s21
    %s25 = sphi 0, %s24
    %s41 = sphi 0, %s25
    %s47 = sphi 0, %s49
    %s50 = sphi 0, %s47
    %s51 = sphi 0, %s50
    %s67 = sphi 0, %s51
    %s71 = sphi 0, %s71
    %s73 = sphi 0, %s71
    %s74 = sphi 0, %s73
    %s88 = sphi 0, %s74
    %s92 = sphi 0, %s92
    %s94 = sphi 0, %s92
    %s95 = sphi 0, %s94
    %s109 = sphi 0, %s95
    %s113 = sphi 0, %s113
    %s115 = sphi 0, %s113
    %s116 = sphi 0, %s115
    %s130 = sphi 0, %s116
    %s136 = sphi 0, %s138
    %s139 = sphi 0, %s136
    %s140 = sphi 0, %s139
    %s156 = sphi 0, %s140
  $region4: #{gin_conv.1} parent=0 // loop_header_branch
    %14 = sbr.rel (%p12) target = $region8
  $region5: #{gin_conv.1} parent=0 // loop_body
    %s16 = ssub.s32 %s11, 1
    %s17 = ssub.s32 %s11, 2
    %s18 = sadd.s32 %s11, 1
    %s19 = ssub.s32 %s11, %s18
    %p20 = scmp.eq.s32.totalorder %s19, 0
    %s22 = sadd.s32 %s21, 1
    %s23 = scalar_select %p20, %s21, %s22
    %p26 = pneg %p20
    %p27 = scmp.eq.s32.totalorder %s11, 1
    %p28 = por %p26, %p27
    %p29 = scmp.ne.s32.totalorder %s21, %s24
    %p30 = scmp.eq.s32.totalorder %s11, 0
    %p31 = por %p29, %p30
    %p32 = scmp.ne.s32.totalorder %s21, %s24
    %p33 = scmp.eq.s32.totalorder %s16, 1
    %p34 = por %p32, %p33
    %p35 = scmp.ne.s32.totalorder %s24, %s25
    %p36 = scmp.eq.s32.totalorder %s16, 0
    %p37 = por %p35, %p36
    %p38 = scmp.ne.s32.totalorder %s24, %s25
    %p39 = scmp.eq.s32.totalorder %s17, 1
    %p40 = por %p38, %p39
    %p42 = scmp.ne.s32.totalorder %s25, %s41
    %p43 = scmp.eq.s32.totalorder %s17, 0
    %p44 = por %p42, %p43
    %s45 = ssub.s32 %s11, %s18
    %p46 = scmp.eq.s32.totalorder %s45, 0
    %s48 = sadd.s32 %s47, 1
    %s49 = scalar_select %p46, %s47, %s48
    %p52 = pneg %p46
    %p53 = scmp.eq.s32.totalorder %s11, 1
    %p54 = por %p52, %p53
    %p55 = scmp.ne.s32.totalorder %s47, %s50
    %p56 = scmp.eq.s32.totalorder %s11, 0
    %p57 = por %p55, %p56
    %p58 = scmp.ne.s32.totalorder %s47, %s50
    %p59 = scmp.eq.s32.totalorder %s16, 1
    %p60 = por %p58, %p59
    %p61 = scmp.ne.s32.totalorder %s50, %s51
    %p62 = scmp.eq.s32.totalorder %s16, 0
    %p63 = por %p61, %p62
    %p64 = scmp.ne.s32.totalorder %s50, %s51
    %p65 = scmp.eq.s32.totalorder %s17, 1
    %p66 = por %p64, %p65
    %p68 = scmp.ne.s32.totalorder %s51, %s67
    %p69 = scmp.eq.s32.totalorder %s17, 0
    %p70 = por %p68, %p69
    %s72 = sadd.s32 %s71, 1
    %p75 = scmp.eq.s32.totalorder %s11, 1
    %p76 = scmp.ne.s32.totalorder %s71, %s73
    %p77 = scmp.eq.s32.totalorder %s11, 0
    %p78 = por %p76, %p77
    %p79 = scmp.ne.s32.totalorder %s71, %s73
    %p80 = scmp.eq.s32.totalorder %s16, 1
    %p81 = por %p79, %p80
    %p82 = scmp.ne.s32.totalorder %s73, %s74
    %p83 = scmp.eq.s32.totalorder %s16, 0
    %p84 = por %p82, %p83
    %p85 = scmp.ne.s32.totalorder %s73, %s74
    %p86 = scmp.eq.s32.totalorder %s17, 1
    %p87 = por %p85, %p86
    %p89 = scmp.ne.s32.totalorder %s74, %s88
    %p90 = scmp.eq.s32.totalorder %s17, 0
    %p91 = por %p89, %p90
    %s93 = sadd.s32 %s92, 1
    %p96 = scmp.eq.s32.totalorder %s11, 1
    %p97 = scmp.ne.s32.totalorder %s92, %s94
    %p98 = scmp.eq.s32.totalorder %s11, 0
    %p99 = por %p97, %p98
    %p100 = scmp.ne.s32.totalorder %s92, %s94
    %p101 = scmp.eq.s32.totalorder %s16, 1
    %p102 = por %p100, %p101
    %p103 = scmp.ne.s32.totalorder %s94, %s95
    %p104 = scmp.eq.s32.totalorder %s16, 0
    %p105 = por %p103, %p104
    %p106 = scmp.ne.s32.totalorder %s94, %s95
    %p107 = scmp.eq.s32.totalorder %s17, 1
    %p108 = por %p106, %p107
    %p110 = scmp.ne.s32.totalorder %s95, %s109
    %p111 = scmp.eq.s32.totalorder %s17, 0
    %p112 = por %p110, %p111
    %s114 = sadd.s32 %s113, 1
    %p117 = scmp.eq.s32.totalorder %s11, 1
    %p118 = scmp.ne.s32.totalorder %s113, %s115
    %p119 = scmp.eq.s32.totalorder %s11, 0
    %p120 = por %p118, %p119
    %p121 = scmp.ne.s32.totalorder %s113, %s115
    %p122 = scmp.eq.s32.totalorder %s16, 1
    %p123 = por %p121, %p122
    %p124 = scmp.ne.s32.totalorder %s115, %s116
    %p125 = scmp.eq.s32.totalorder %s16, 0
    %p126 = por %p124, %p125
    %p127 = scmp.ne.s32.totalorder %s115, %s116
    %p128 = scmp.eq.s32.totalorder %s17, 1
    %p129 = por %p127, %p128
    %p131 = scmp.ne.s32.totalorder %s116, %s130
    %p132 = scmp.eq.s32.totalorder %s17, 0
    %p133 = por %p131, %p132
    %s134 = ssub.s32 %s11, %s18
    %p135 = scmp.eq.s32.totalorder %s134, 0
    %s137 = sadd.s32 %s136, 1
    %s138 = scalar_select %p135, %s136, %s137
    %p141 = pneg %p135
    %p142 = scmp.eq.s32.totalorder %s11, 1
    %p143 = por %p141, %p142
    %p144 = scmp.ne.s32.totalorder %s136, %s139
    %p145 = scmp.eq.s32.totalorder %s11, 0
    %p146 = por %p144, %p145
    %p147 = scmp.ne.s32.totalorder %s136, %s139
    %p148 = scmp.eq.s32.totalorder %s16, 1
    %p149 = por %p147, %p148
    %p150 = scmp.ne.s32.totalorder %s139, %s140
    %p151 = scmp.eq.s32.totalorder %s16, 0
    %p152 = por %p150, %p151
    %p153 = scmp.ne.s32.totalorder %s139, %s140
    %p154 = scmp.eq.s32.totalorder %s17, 1
    %p155 = por %p153, %p154
    %p157 = scmp.ne.s32.totalorder %s140, %s156
    %p158 = scmp.eq.s32.totalorder %s17, 0
    %p159 = por %p157, %p158
    %p160 = scmp.le.s32.totalorder 1, %s11
    %p161 = scmp.lt.s32.totalorder %s11, 3
    %p162 = pnand %p160, %p161
    %p163 = pneg %p162
    // Predicated region
    $region9: #{gin_conv.1} parent=5 // pred_check
      _
    $region10: #{gin_conv.1} parent=5 // pred_check_branch
      %165 = sbr.rel (%p162) target = $region12
    $region11: #{gin_conv.1} parent=5 // pred_region
      %s166 = ssub.s32 %s11, 1
      // Predicated region
      $region13: #{gin_conv.1} parent=11 // pred_check
        %p167 = pneg %p84
      $region14: #{gin_conv.1} parent=11 // pred_check_branch
        %169 = sbr.rel (%p167) target = $region16
      $region15: #{gin_conv.1} parent=11 // pred_region
        _
      $region16: #{gin_conv.1} parent=11 // pred_fallthru
        _
      // Predicated region
      $region17: #{gin_conv.1} parent=11 // pred_check
        %p170 = pneg %p105
      $region18: #{gin_conv.1} parent=11 // pred_check_branch
        %172 = sbr.rel (%p170) target = $region20
      $region19: #{gin_conv.1} parent=11 // pred_region
        _
      $region20: #{gin_conv.1} parent=11 // pred_fallthru
        _
      // Predicated region
      $region21: #{gin_conv.1} parent=11 // pred_check
        %p173 = pneg %p126
      $region22: #{gin_conv.1} parent=11 // pred_check_branch
        %175 = sbr.rel (%p173) target = $region24
      $region23: #{gin_conv.1} parent=11 // pred_region
        _
      $region24: #{gin_conv.1} parent=11 // pred_fallthru
        _
    $region12: #{gin_conv.1} parent=5 // pred_fallthru
      _
    %p176 = scmp.lt.s32.totalorder %s11, 2
    // Predicated region
    $region25: #{gin_conv.1} parent=5 // pred_check
      %p177 = pneg %p176
    $region26: #{gin_conv.1} parent=5 // pred_check_branch
      %179 = sbr.rel (%p177) target = $region28
    $region27: #{gin_conv.1} parent=5 // pred_region
      // Predicated region
      $region29: #{gin_conv.1} parent=27 // pred_check
        %p180 = pneg %p31
      $region30: #{gin_conv.1} parent=27 // pred_check_branch
        %182 = sbr.rel (%p180) target = $region32
      $region31: #{gin_conv.1} parent=27 // pred_region
        %s183 = smul.u32 48, %s11
        %p184 = scmp.lt.s32.totalorder %s183, 95
        %s185 = scalar_select %p184, %s183, 95
        %s186 = smul.addr %s185, 6
        %s187 = smul.addr %s186, 4
        %s188 = scalar_lea.vmem %s0, %s187
        %s189 = smul.u32 48, %s11
      $region32: #{gin_conv.1} parent=27 // pred_fallthru
        _
      // Predicated region
      $region33: #{gin_conv.1} parent=27 // pred_check
        %p190 = pneg %p57
      $region34: #{gin_conv.1} parent=27 // pred_check_branch
        %192 = sbr.rel (%p190) target = $region36
      $region35: #{gin_conv.1} parent=27 // pred_region
        %s193 = smul.u32 48, %s11
        %p194 = scmp.lt.s32.totalorder %s193, 95
        %s195 = scalar_select %p194, %s193, 95
        %s196 = smul.addr %s195, 8
        %s197 = scalar_lea.vmem %s1, %s196
        %s198 = smul.u32 48, %s11
      $region36: #{gin_conv.1} parent=27 // pred_fallthru
        _
    $region28: #{gin_conv.1} parent=5 // pred_fallthru
      _
    %p199 = scmp.le.s32.totalorder 1, %s11
    %p200 = scmp.lt.s32.totalorder %s11, 3
    %p201 = pnand %p199, %p200
    %p202 = pneg %p201
    // Predicated region
    $region37: #{gin_conv.1} parent=5 // pred_check
      _
    $region38: #{gin_conv.1} parent=5 // pred_check_branch
      %204 = sbr.rel (%p201) target = $region40
    $region39: #{gin_conv.1} parent=5 // pred_region
      %s205 = ssub.s32 %s11, 1
      %s206 = smul.u32 48, %s16
      %p207 = scmp.lt.s32.totalorder %s206, 95
      %s208 = scalar_select %p207, %s206, 95
      %s209 = smul.addr %s208, 6
      %s210 = smul.addr %s209, 4
      %s211 = scalar_lea.vmem %s0, %s210
      %p212 = pneg %p37
      %p213 = pneg %p34
      %s214 = smul.u32 48, %s16
      %p215 = scmp.lt.s32.totalorder %s214, 95
      %s216 = scalar_select %p215, %s214, 95
      %s217 = smul.addr %s216, 8
      %s218 = scalar_lea.vmem %s1, %s217
      %p219 = pneg %p63
      %p220 = pneg %p60
      %p221 = pneg %p84
      %p222 = pneg %p81
      %p223 = pneg %p105
      %p224 = pneg %p102
      %p225 = pneg %p126
      %p226 = pneg %p123
      %p227 = pneg %p152
      %p228 = pneg %p149
      %s229 = smul.u32 48, %s16
      %p230 = scmp.lt.s32.totalorder %s229, 95
      %s231 = scalar_select %p230, %s229, 95
      %s232 = smul.addr %s231, 8
      %s233 = scalar_lea.vmem %s5, %s232
      %s234 = smul.u32 48, %s16
      %p235 = scmp.lt.s32.totalorder %s234, 95
      %s236 = scalar_select %p235, %s234, 95
      %s237 = smul.addr %s236, 6
      %s238 = smul.addr %s237, 4
      %s239 = scalar_lea.vmem %s0, %s238
      %s240 = smul.u32 48, %s16
      %s241 = smul.u32 48, %s16
      %p242 = scmp.lt.s32.totalorder %s241, 95
      %s243 = scalar_select %p242, %s241, 95
      %s244 = smul.addr %s243, 8
      %s245 = scalar_lea.vmem %s1, %s244
      %s246 = smul.u32 48, %s16
      %s247 = smul.u32 48, %s16
      %p248 = scmp.lt.s32.totalorder %s247, 95
      %s249 = scalar_select %p248, %s247, 95
      %s250 = smul.addr %s249, 8
      %s251 = scalar_lea.vmem %s5, %s250
      %s252 = smul.u32 48, %s16
      %v254 = vld [vmem:[%s239] sm:$0xff]
      %v255 = vld [vmem:[%s239 + $0x8] sm:$0xff]
      %v256 = vld [vmem:[%s239 + $0x10] sm:$0xff]
      %v257 = vld [vmem:[%s239 + $0x18] sm:$0xff]
      %v258 = vld [vmem:[%s239 + $0x20] sm:$0xff]
      %v259 = vld [vmem:[%s239 + $0x28] sm:$0xff]
      %v260 = vld [vmem:[%s239 + $0x30] sm:$0xff]
      %v261 = vld [vmem:[%s239 + $0x38] sm:$0xff]
      %v262 = vld [vmem:[%s239 + $0x40] sm:$0xff]
      %v263 = vld [vmem:[%s239 + $0x48] sm:$0xff]
      %v264 = vld [vmem:[%s239 + $0x50] sm:$0xff]
      %v265 = vld [vmem:[%s239 + $0x58] sm:$0xff]
      %v266 = vld [vmem:[%s239 + $0x60] sm:$0xff]
      %v267 = vld [vmem:[%s239 + $0x68] sm:$0xff]
      %v268 = vld [vmem:[%s239 + $0x70] sm:$0xff]
      %v269 = vld [vmem:[%s239 + $0x78] sm:$0xff]
      %v270 = vld [vmem:[%s239 + $0x80] sm:$0xff]
      %v271 = vld [vmem:[%s239 + $0x88] sm:$0xff]
      %v272 = vld [vmem:[%s239 + $0x90] sm:$0xff]
      %v273 = vld [vmem:[%s239 + $0x98] sm:$0xff]
      %v274 = vld [vmem:[%s239 + $0xa0] sm:$0xff]
      %v275 = vld [vmem:[%s239 + $0xa8] sm:$0xff]
      %v276 = vld [vmem:[%s239 + $0xb0] sm:$0xff]
      %v277 = vld [vmem:[%s239 + $0xb8] sm:$0xff]
      %v278 = vld [vmem:[%s239 + $0xc0] sm:$0xff]
      %v279 = vld [vmem:[%s239 + $0xc8] sm:$0xff]
      %v280 = vld [vmem:[%s239 + $0xd0] sm:$0xff]
      %v281 = vld [vmem:[%s239 + $0xd8] sm:$0xff]
      %v282 = vld [vmem:[%s239 + $0xe0] sm:$0xff]
      %v283 = vld [vmem:[%s239 + $0xe8] sm:$0xff]
      %v284 = vld [vmem:[%s239 + $0xf0] sm:$0xff]
      %v285 = vld [vmem:[%s239 + $0xf8] sm:$0xff]
      %v286 = vld [vmem:[%s239 + $0x100] sm:$0xff]
      %v287 = vld [vmem:[%s239 + $0x108] sm:$0xff]
      %v288 = vld [vmem:[%s239 + $0x110] sm:$0xff]
      %v289 = vld [vmem:[%s239 + $0x118] sm:$0xff]
      %v290 = vld [vmem:[%s239 + $0x120] sm:$0xff]
      %v291 = vld [vmem:[%s239 + $0x128] sm:$0xff]
      %v292 = vld [vmem:[%s239 + $0x130] sm:$0xff]
      %v293 = vld [vmem:[%s239 + $0x138] sm:$0xff]
      %v294 = vld [vmem:[%s239 + $0x140] sm:$0xff]
      %v295 = vld [vmem:[%s239 + $0x148] sm:$0xff]
      %v296 = vld [vmem:[%s239 + $0x150] sm:$0xff]
      %v297 = vld [vmem:[%s239 + $0x158] sm:$0xff]
      %v298 = vld [vmem:[%s239 + $0x160] sm:$0xff]
      %v299 = vld [vmem:[%s239 + $0x168] sm:$0xff]
      %v300 = vld [vmem:[%s239 + $0x170] sm:$0xff]
      %v301 = vld [vmem:[%s239 + $0x178] sm:$0xff]
      %v302 = vld [vmem:[%s239 + $0x180] sm:$0xff]
      %v303 = vld [vmem:[%s239 + $0x188] sm:$0xff]
      %v304 = vld [vmem:[%s239 + $0x190] sm:$0xff]
      %v305 = vld [vmem:[%s239 + $0x198] sm:$0xff]
      %v306 = vld [vmem:[%s239 + $0x1a0] sm:$0xff]
      %v307 = vld [vmem:[%s239 + $0x1a8] sm:$0xff]
      %v308 = vld [vmem:[%s239 + $0x1b0] sm:$0xff]
      %v309 = vld [vmem:[%s239 + $0x1b8] sm:$0xff]
      %v310 = vld [vmem:[%s239 + $0x1c0] sm:$0xff]
      %v311 = vld [vmem:[%s239 + $0x1c8] sm:$0xff]
      %v312 = vld [vmem:[%s239 + $0x1d0] sm:$0xff]
      %v313 = vld [vmem:[%s239 + $0x1d8] sm:$0xff]
      %v314 = vld [vmem:[%s239 + $0x1e0] sm:$0xff]
      %v315 = vld [vmem:[%s239 + $0x1e8] sm:$0xff]
      %v316 = vld [vmem:[%s239 + $0x1f0] sm:$0xff]
      %v317 = vld [vmem:[%s239 + $0x1f8] sm:$0xff]
      %v318 = vld [vmem:[%s239 + $0x200] sm:$0xff]
      %v319 = vld [vmem:[%s239 + $0x208] sm:$0xff]
      %v320 = vld [vmem:[%s239 + $0x210] sm:$0xff]
      %v321 = vld [vmem:[%s239 + $0x218] sm:$0xff]
      %v322 = vld [vmem:[%s239 + $0x220] sm:$0xff]
      %v323 = vld [vmem:[%s239 + $0x228] sm:$0xff]
      %v324 = vld [vmem:[%s239 + $0x230] sm:$0xff]
      %v325 = vld [vmem:[%s239 + $0x238] sm:$0xff]
      %v326 = vld [vmem:[%s239 + $0x240] sm:$0xff]
      %v327 = vld [vmem:[%s239 + $0x248] sm:$0xff]
      %v328 = vld [vmem:[%s239 + $0x250] sm:$0xff]
      %v329 = vld [vmem:[%s239 + $0x258] sm:$0xff]
      %v330 = vld [vmem:[%s239 + $0x260] sm:$0xff]
      %v331 = vld [vmem:[%s239 + $0x268] sm:$0xff]
      %v332 = vld [vmem:[%s239 + $0x270] sm:$0xff]
      %v333 = vld [vmem:[%s239 + $0x278] sm:$0xff]
      %v334 = vld [vmem:[%s239 + $0x280] sm:$0xff]
      %v335 = vld [vmem:[%s239 + $0x288] sm:$0xff]
      %v336 = vld [vmem:[%s239 + $0x290] sm:$0xff]
      %v337 = vld [vmem:[%s239 + $0x298] sm:$0xff]
      %v338 = vld [vmem:[%s239 + $0x2a0] sm:$0xff]
      %v339 = vld [vmem:[%s239 + $0x2a8] sm:$0xff]
      %v340 = vld [vmem:[%s239 + $0x2b0] sm:$0xff]
      %v341 = vld [vmem:[%s239 + $0x2b8] sm:$0xff]
      %v342 = vld [vmem:[%s239 + $0x2c0] sm:$0xff]
      %v343 = vld [vmem:[%s239 + $0x2c8] sm:$0xff]
      %v344 = vld [vmem:[%s239 + $0x2d0] sm:$0xff]
      %v345 = vld [vmem:[%s239 + $0x2d8] sm:$0xff]
      %v346 = vld [vmem:[%s239 + $0x2e0] sm:$0xff]
      %v347 = vld [vmem:[%s239 + $0x2e8] sm:$0xff]
      %v348 = vld [vmem:[%s239 + $0x2f0] sm:$0xff]
      %v349 = vld [vmem:[%s239 + $0x2f8] sm:$0xff]
      %v350 = vld [vmem:[%s239 + $0x300] sm:$0xff]
      %v351 = vld [vmem:[%s239 + $0x308] sm:$0xff]
      %v352 = vld [vmem:[%s239 + $0x310] sm:$0xff]
      %v353 = vld [vmem:[%s239 + $0x318] sm:$0xff]
      %v354 = vld [vmem:[%s239 + $0x320] sm:$0xff]
      %v355 = vld [vmem:[%s239 + $0x328] sm:$0xff]
      %v356 = vld [vmem:[%s239 + $0x330] sm:$0xff]
      %v357 = vld [vmem:[%s239 + $0x338] sm:$0xff]
      %v358 = vld [vmem:[%s239 + $0x340] sm:$0xff]
      %v359 = vld [vmem:[%s239 + $0x348] sm:$0xff]
      %v360 = vld [vmem:[%s239 + $0x350] sm:$0xff]
      %v361 = vld [vmem:[%s239 + $0x358] sm:$0xff]
      %v362 = vld [vmem:[%s239 + $0x360] sm:$0xff]
      %v363 = vld [vmem:[%s239 + $0x368] sm:$0xff]
      %v364 = vld [vmem:[%s239 + $0x370] sm:$0xff]
      %v365 = vld [vmem:[%s239 + $0x378] sm:$0xff]
      %v366 = vld [vmem:[%s239 + $0x380] sm:$0xff]
      %v367 = vld [vmem:[%s239 + $0x388] sm:$0xff]
      %v368 = vld [vmem:[%s239 + $0x390] sm:$0xff]
      %v369 = vld [vmem:[%s239 + $0x398] sm:$0xff]
      %v370 = vld [vmem:[%s239 + $0x3a0] sm:$0xff]
      %v371 = vld [vmem:[%s239 + $0x3a8] sm:$0xff]
      %v372 = vld [vmem:[%s239 + $0x3b0] sm:$0xff]
      %v373 = vld [vmem:[%s239 + $0x3b8] sm:$0xff]
      %v374 = vld [vmem:[%s239 + $0x3c0] sm:$0xff]
      %v375 = vld [vmem:[%s239 + $0x3c8] sm:$0xff]
      %v376 = vld [vmem:[%s239 + $0x3d0] sm:$0xff]
      %v377 = vld [vmem:[%s239 + $0x3d8] sm:$0xff]
      %v378 = vld [vmem:[%s239 + $0x3e0] sm:$0xff]
      %v379 = vld [vmem:[%s239 + $0x3e8] sm:$0xff]
      %v380 = vld [vmem:[%s239 + $0x3f0] sm:$0xff]
      %v381 = vld [vmem:[%s239 + $0x3f8] sm:$0xff]
      %v382 = vld [vmem:[%s239 + $0x400] sm:$0xff]
      %v383 = vld [vmem:[%s239 + $0x408] sm:$0xff]
      %v384 = vld [vmem:[%s239 + $0x410] sm:$0xff]
      %v385 = vld [vmem:[%s239 + $0x418] sm:$0xff]
      %v386 = vld [vmem:[%s239 + $0x420] sm:$0xff]
      %v387 = vld [vmem:[%s239 + $0x428] sm:$0xff]
      %v388 = vld [vmem:[%s239 + $0x430] sm:$0xff]
      %v389 = vld [vmem:[%s239 + $0x438] sm:$0xff]
      %v390 = vld [vmem:[%s239 + $0x440] sm:$0xff]
      %v391 = vld [vmem:[%s239 + $0x448] sm:$0xff]
      %v392 = vld [vmem:[%s239 + $0x450] sm:$0xff]
      %v393 = vld [vmem:[%s239 + $0x458] sm:$0xff]
      %v394 = vld [vmem:[%s239 + $0x460] sm:$0xff]
      %v395 = vld [vmem:[%s239 + $0x468] sm:$0xff]
      %v396 = vld [vmem:[%s239 + $0x470] sm:$0xff]
      %v397 = vld [vmem:[%s239 + $0x478] sm:$0xff]
      %v398 = vld [vmem:[%s2] sm:$0xf]
      %v399 = vld [vmem:[%s2 + $0x4] sm:$0xf]
      %v400 = vld [vmem:[%s2 + $0x8] sm:$0xf]
      %v401 = vld [vmem:[%s2 + $0xc] sm:$0xf]
      %v402 = vld [vmem:[%s2 + $0x10] sm:$0xf]
      %v403 = vld [vmem:[%s2 + $0x14] sm:$0xf]
      %v404 = vld [vmem:[%s2 + $0x18] sm:$0xf]
      %v405 = vld [vmem:[%s2 + $0x1c] sm:$0xf]
      %v406 = vld [vmem:[%s2 + $0x20] sm:$0xf]
      %v407 = vld [vmem:[%s2 + $0x24] sm:$0xf]
      %v408 = vld [vmem:[%s2 + $0x28] sm:$0xf]
      %v409 = vld [vmem:[%s2 + $0x2c] sm:$0xf]
      %v410 = vld [vmem:[%s2 + $0x30] sm:$0xf]
      %v411 = vld [vmem:[%s2 + $0x34] sm:$0xf]
      %v412 = vld [vmem:[%s2 + $0x38] sm:$0xf]
      %v413 = vld [vmem:[%s2 + $0x3c] sm:$0xf]
      %v414 = vld [vmem:[%s2 + $0x40] sm:$0xf]
      %v415 = vld [vmem:[%s2 + $0x44] sm:$0xf]
      %v416 = vld [vmem:[%s2 + $0x48] sm:$0xf]
      %v417 = vld [vmem:[%s2 + $0x4c] sm:$0xf]
      %v418 = vld [vmem:[%s2 + $0x50] sm:$0xf]
      %v419 = vld [vmem:[%s2 + $0x54] sm:$0xf]
      %v420 = vld [vmem:[%s2 + $0x58] sm:$0xf]
      %v421 = vld [vmem:[%s2 + $0x5c] sm:$0xf]
      %v422 = vld [vmem:[%s2 + $0x60] sm:$0xf]
      %v423 = vld [vmem:[%s2 + $0x64] sm:$0xf]
      %v424 = vld [vmem:[%s2 + $0x68] sm:$0xf]
      %v425 = vld [vmem:[%s2 + $0x6c] sm:$0xf]
      %v426 = vld [vmem:[%s2 + $0x70] sm:$0xf]
      %v427 = vld [vmem:[%s2 + $0x74] sm:$0xf]
      %v428 = vld [vmem:[%s2 + $0x78] sm:$0xf]
      %v429 = vld [vmem:[%s2 + $0x7c] sm:$0xf]
      %v430 = vld [vmem:[%s2 + $0x80] sm:$0xf]
      %v431 = vld [vmem:[%s2 + $0x84] sm:$0xf]
      %v432 = vld [vmem:[%s2 + $0x88] sm:$0xf]
      %v433 = vld [vmem:[%s2 + $0x8c] sm:$0xf]
      %v434 = vld [vmem:[%s2 + $0x90] sm:$0xf]
      %v435 = vld [vmem:[%s2 + $0x94] sm:$0xf]
      %v436 = vld [vmem:[%s2 + $0x98] sm:$0xf]
      %v437 = vld [vmem:[%s2 + $0x9c] sm:$0xf]
      %v438 = vld [vmem:[%s2 + $0xa0] sm:$0xf]
      %v439 = vld [vmem:[%s2 + $0xa4] sm:$0xf]
      %v440 = vld [vmem:[%s2 + $0xa8] sm:$0xf]
      %v441 = vld [vmem:[%s2 + $0xac] sm:$0xf]
      %v442 = vld [vmem:[%s2 + $0xb0] sm:$0xf]
      %v443 = vld [vmem:[%s2 + $0xb4] sm:$0xf]
      %v444 = vld [vmem:[%s2 + $0xb8] sm:$0xf]
      %v445 = vld [vmem:[%s2 + $0xbc] sm:$0xf]
      %v446 = vld [vmem:[%s2 + $0xc0] sm:$0xf]
      %v447 = vld [vmem:[%s2 + $0xc4] sm:$0xf]
      %v448 = vld [vmem:[%s2 + $0xc8] sm:$0xf]
      %v449 = vld [vmem:[%s2 + $0xcc] sm:$0xf]
      %v450 = vld [vmem:[%s2 + $0xd0] sm:$0xf]
      %v451 = vld [vmem:[%s2 + $0xd4] sm:$0xf]
      %v452 = vld [vmem:[%s2 + $0xd8] sm:$0xf]
      %v453 = vld [vmem:[%s2 + $0xdc] sm:$0xf]
      %v454 = vld [vmem:[%s2 + $0xe0] sm:$0xf]
      %v455 = vld [vmem:[%s2 + $0xe4] sm:$0xf]
      %v456 = vld [vmem:[%s2 + $0xe8] sm:$0xf]
      %v457 = vld [vmem:[%s2 + $0xec] sm:$0xf]
      %v458 = vld [vmem:[%s2 + $0xf0] sm:$0xf]
      %v459 = vld [vmem:[%s2 + $0xf4] sm:$0xf]
      %v460 = vld [vmem:[%s2 + $0xf8] sm:$0xf]
      %v461 = vld [vmem:[%s2 + $0xfc] sm:$0xf]
      %v462 = vld [vmem:[%s2 + $0x100] sm:$0xf]
      %v463 = vld [vmem:[%s2 + $0x104] sm:$0xf]
      %v464 = vld [vmem:[%s2 + $0x108] sm:$0xf]
      %v465 = vld [vmem:[%s2 + $0x10c] sm:$0xf]
      %v466 = vld [vmem:[%s2 + $0x110] sm:$0xf]
      %v467 = vld [vmem:[%s2 + $0x114] sm:$0xf]
      %v468 = vld [vmem:[%s2 + $0x118] sm:$0xf]
      %v469 = vld [vmem:[%s2 + $0x11c] sm:$0xf]
      %v470 = vld [vmem:[%s2 + $0x120] sm:$0xf]
      %v471 = vld [vmem:[%s2 + $0x124] sm:$0xf]
      %v472 = vld [vmem:[%s2 + $0x128] sm:$0xf]
      %v473 = vld [vmem:[%s2 + $0x12c] sm:$0xf]
      %v474 = vld [vmem:[%s2 + $0x130] sm:$0xf]
      %v475 = vld [vmem:[%s2 + $0x134] sm:$0xf]
      %v476 = vld [vmem:[%s2 + $0x138] sm:$0xf]
      %v477 = vld [vmem:[%s2 + $0x13c] sm:$0xf]
      %v478 = vld [vmem:[%s2 + $0x140] sm:$0xf]
      %v479 = vld [vmem:[%s2 + $0x144] sm:$0xf]
      %v480 = vld [vmem:[%s2 + $0x148] sm:$0xf]
      %v481 = vld [vmem:[%s2 + $0x14c] sm:$0xf]
      %v482 = vld [vmem:[%s2 + $0x150] sm:$0xf]
      %v483 = vld [vmem:[%s2 + $0x154] sm:$0xf]
      %v484 = vld [vmem:[%s2 + $0x158] sm:$0xf]
      %v485 = vld [vmem:[%s2 + $0x15c] sm:$0xf]
      %v486 = vld [vmem:[%s2 + $0x160] sm:$0xf]
      %v487 = vld [vmem:[%s2 + $0x164] sm:$0xf]
      %v488 = vld [vmem:[%s2 + $0x168] sm:$0xf]
      %v489 = vld [vmem:[%s2 + $0x16c] sm:$0xf]
      %v490 = vld [vmem:[%s2 + $0x170] sm:$0xf]
      %v491 = vld [vmem:[%s2 + $0x174] sm:$0xf]
      %v492 = vld [vmem:[%s2 + $0x178] sm:$0xf]
      %v493 = vld [vmem:[%s2 + $0x17c] sm:$0xf]
      %v494 = vld [vmem:[%s245] sm:$0xff]
      %v495 = vld [vmem:[%s245 + $0x8] sm:$0xff]
      %v496 = vld [vmem:[%s245 + $0x10] sm:$0xff]
      %v497 = vld [vmem:[%s245 + $0x18] sm:$0xff]
      %v498 = vld [vmem:[%s245 + $0x20] sm:$0xff]
      %v499 = vld [vmem:[%s245 + $0x28] sm:$0xff]
      %v500 = vld [vmem:[%s245 + $0x30] sm:$0xff]
      %v501 = vld [vmem:[%s245 + $0x38] sm:$0xff]
      %v502 = vld [vmem:[%s245 + $0x40] sm:$0xff]
      %v503 = vld [vmem:[%s245 + $0x48] sm:$0xff]
      %v504 = vld [vmem:[%s245 + $0x50] sm:$0xff]
      %v505 = vld [vmem:[%s245 + $0x58] sm:$0xff]
      %v506 = vld [vmem:[%s245 + $0x60] sm:$0xff]
      %v507 = vld [vmem:[%s245 + $0x68] sm:$0xff]
      %v508 = vld [vmem:[%s245 + $0x70] sm:$0xff]
      %v509 = vld [vmem:[%s245 + $0x78] sm:$0xff]
      %v510 = vld [vmem:[%s245 + $0x80] sm:$0xff]
      %v511 = vld [vmem:[%s245 + $0x88] sm:$0xff]
      %v512 = vld [vmem:[%s245 + $0x90] sm:$0xff]
      %v513 = vld [vmem:[%s245 + $0x98] sm:$0xff]
      %v514 = vld [vmem:[%s245 + $0xa0] sm:$0xff]
      %v515 = vld [vmem:[%s245 + $0xa8] sm:$0xff]
      %v516 = vld [vmem:[%s245 + $0xb0] sm:$0xff]
      %v517 = vld [vmem:[%s245 + $0xb8] sm:$0xff]
      %v518 = vld [vmem:[%s245 + $0xc0] sm:$0xff]
      %v519 = vld [vmem:[%s245 + $0xc8] sm:$0xff]
      %v520 = vld [vmem:[%s245 + $0xd0] sm:$0xff]
      %v521 = vld [vmem:[%s245 + $0xd8] sm:$0xff]
      %v522 = vld [vmem:[%s245 + $0xe0] sm:$0xff]
      %v523 = vld [vmem:[%s245 + $0xe8] sm:$0xff]
      %v524 = vld [vmem:[%s245 + $0xf0] sm:$0xff]
      %v525 = vld [vmem:[%s245 + $0xf8] sm:$0xff]
      %v526 = vld [vmem:[%s245 + $0x100] sm:$0xff]
      %v527 = vld [vmem:[%s245 + $0x108] sm:$0xff]
      %v528 = vld [vmem:[%s245 + $0x110] sm:$0xff]
      %v529 = vld [vmem:[%s245 + $0x118] sm:$0xff]
      %v530 = vld [vmem:[%s245 + $0x120] sm:$0xff]
      %v531 = vld [vmem:[%s245 + $0x128] sm:$0xff]
      %v532 = vld [vmem:[%s245 + $0x130] sm:$0xff]
      %v533 = vld [vmem:[%s245 + $0x138] sm:$0xff]
      %v534 = vld [vmem:[%s245 + $0x140] sm:$0xff]
      %v535 = vld [vmem:[%s245 + $0x148] sm:$0xff]
      %v536 = vld [vmem:[%s245 + $0x150] sm:$0xff]
      %v537 = vld [vmem:[%s245 + $0x158] sm:$0xff]
      %v538 = vld [vmem:[%s245 + $0x160] sm:$0xff]
      %v539 = vld [vmem:[%s245 + $0x168] sm:$0xff]
      %v540 = vld [vmem:[%s245 + $0x170] sm:$0xff]
      %v541 = vld [vmem:[%s245 + $0x178] sm:$0xff]
      %v542 = vmul.f32 %v494, 1.1
      %v543 = vmul.f32 %v495, 1.1
      %v544 = vmul.f32 %v496, 1.1
      %v545 = vmul.f32 %v497, 1.1
      %v546 = vmul.f32 %v498, 1.1
      %v547 = vmul.f32 %v499, 1.1
      %v548 = vmul.f32 %v500, 1.1
      %v549 = vmul.f32 %v501, 1.1
      %v550 = vmul.f32 %v502, 1.1
      %v551 = vmul.f32 %v503, 1.1
      %v552 = vmul.f32 %v504, 1.1
      %v553 = vmul.f32 %v505, 1.1
      %v554 = vmul.f32 %v506, 1.1
      %v555 = vmul.f32 %v507, 1.1
      %v556 = vmul.f32 %v508, 1.1
      %v557 = vmul.f32 %v509, 1.1
      %v558 = vmul.f32 %v510, 1.1
      %v559 = vmul.f32 %v511, 1.1
      %v560 = vmul.f32 %v512, 1.1
      %v561 = vmul.f32 %v513, 1.1
      %v562 = vmul.f32 %v514, 1.1
      %v563 = vmul.f32 %v515, 1.1
      %v564 = vmul.f32 %v516, 1.1
      %v565 = vmul.f32 %v517, 1.1
      %v566 = vmul.f32 %v518, 1.1
      %v567 = vmul.f32 %v519, 1.1
      %v568 = vmul.f32 %v520, 1.1
      %v569 = vmul.f32 %v521, 1.1
      %v570 = vmul.f32 %v522, 1.1
      %v571 = vmul.f32 %v523, 1.1
      %v572 = vmul.f32 %v524, 1.1
      %v573 = vmul.f32 %v525, 1.1
      %v574 = vmul.f32 %v526, 1.1
      %v575 = vmul.f32 %v527, 1.1
      %v576 = vmul.f32 %v528, 1.1
      %v577 = vmul.f32 %v529, 1.1
      %v578 = vmul.f32 %v530, 1.1
      %v579 = vmul.f32 %v531, 1.1
      %v580 = vmul.f32 %v532, 1.1
      %v581 = vmul.f32 %v533, 1.1
      %v582 = vmul.f32 %v534, 1.1
      %v583 = vmul.f32 %v535, 1.1
      %v584 = vmul.f32 %v536, 1.1
      %v585 = vmul.f32 %v537, 1.1
      %v586 = vmul.f32 %v538, 1.1
      %v587 = vmul.f32 %v539, 1.1
      %v588 = vmul.f32 %v540, 1.1
      %v589 = vmul.f32 %v541, 1.1
      %v734 = vunpack.c.l.b16 %v254
      %v735 = vunpack.c.h.b16 %v254
      %v736 = vunpack.c.l.b16 %v255
      %v737 = vunpack.c.h.b16 %v255
      %v738 = vunpack.c.l.b16 %v256
      %v739 = vunpack.c.h.b16 %v256
      %v740 = vunpack.c.l.b16 %v257
      %v741 = vunpack.c.h.b16 %v257
      %v742 = vunpack.c.l.b16 %v258
      %v743 = vunpack.c.h.b16 %v258
      %v744 = vunpack.c.l.b16 %v259
      %v745 = vunpack.c.h.b16 %v259
      %v746 = vunpack.c.l.b16 %v260
      %v747 = vunpack.c.h.b16 %v260
      %v748 = vunpack.c.l.b16 %v261
      %v749 = vunpack.c.h.b16 %v261
      %v750 = vunpack.c.l.b16 %v262
      %v751 = vunpack.c.h.b16 %v262
      %v752 = vunpack.c.l.b16 %v263
      %v753 = vunpack.c.h.b16 %v263
      %v754 = vunpack.c.l.b16 %v264
      %v755 = vunpack.c.h.b16 %v264
      %v756 = vunpack.c.l.b16 %v265
      %v757 = vunpack.c.h.b16 %v265
      %v758 = vunpack.c.l.b16 %v266
      %v759 = vunpack.c.h.b16 %v266
      %v760 = vunpack.c.l.b16 %v267
      %v761 = vunpack.c.h.b16 %v267
      %v762 = vunpack.c.l.b16 %v268
      %v763 = vunpack.c.h.b16 %v268
      %v764 = vunpack.c.l.b16 %v269
      %v765 = vunpack.c.h.b16 %v269
      %v766 = vunpack.c.l.b16 %v270
      %v767 = vunpack.c.h.b16 %v270
      %v768 = vunpack.c.l.b16 %v271
      %v769 = vunpack.c.h.b16 %v271
      %v770 = vunpack.c.l.b16 %v272
      %v771 = vunpack.c.h.b16 %v272
      %v772 = vunpack.c.l.b16 %v273
      %v773 = vunpack.c.h.b16 %v273
      %v774 = vunpack.c.l.b16 %v274
      %v775 = vunpack.c.h.b16 %v274
      %v776 = vunpack.c.l.b16 %v275
      %v777 = vunpack.c.h.b16 %v275
      %v778 = vunpack.c.l.b16 %v276
      %v779 = vunpack.c.h.b16 %v276
      %v780 = vunpack.c.l.b16 %v277
      %v781 = vunpack.c.h.b16 %v277
      %v782 = vunpack.c.l.b16 %v278
      %v783 = vunpack.c.h.b16 %v278
      %v784 = vunpack.c.l.b16 %v279
      %v785 = vunpack.c.h.b16 %v279
      %v786 = vunpack.c.l.b16 %v280
      %v787 = vunpack.c.h.b16 %v280
      %v788 = vunpack.c.l.b16 %v281
      %v789 = vunpack.c.h.b16 %v281
      %v790 = vunpack.c.l.b16 %v282
      %v791 = vunpack.c.h.b16 %v282
      %v792 = vunpack.c.l.b16 %v283
      %v793 = vunpack.c.h.b16 %v283
      %v794 = vunpack.c.l.b16 %v284
      %v795 = vunpack.c.h.b16 %v284
      %v796 = vunpack.c.l.b16 %v285
      %v797 = vunpack.c.h.b16 %v285
      %v798 = vunpack.c.l.b16 %v286
      %v799 = vunpack.c.h.b16 %v286
      %v800 = vunpack.c.l.b16 %v287
      %v801 = vunpack.c.h.b16 %v287
      %v802 = vunpack.c.l.b16 %v288
      %v803 = vunpack.c.h.b16 %v288
      %v804 = vunpack.c.l.b16 %v289
      %v805 = vunpack.c.h.b16 %v289
      %v806 = vunpack.c.l.b16 %v290
      %v807 = vunpack.c.h.b16 %v290
      %v808 = vunpack.c.l.b16 %v291
      %v809 = vunpack.c.h.b16 %v291
      %v810 = vunpack.c.l.b16 %v292
      %v811 = vunpack.c.h.b16 %v292
      %v812 = vunpack.c.l.b16 %v293
      %v813 = vunpack.c.h.b16 %v293
      %v814 = vunpack.c.l.b16 %v294
      %v815 = vunpack.c.h.b16 %v294
      %v816 = vunpack.c.l.b16 %v295
      %v817 = vunpack.c.h.b16 %v295
      %v818 = vunpack.c.l.b16 %v296
      %v819 = vunpack.c.h.b16 %v296
      %v820 = vunpack.c.l.b16 %v297
      %v821 = vunpack.c.h.b16 %v297
      %v822 = vunpack.c.l.b16 %v298
      %v823 = vunpack.c.h.b16 %v298
      %v824 = vunpack.c.l.b16 %v299
      %v825 = vunpack.c.h.b16 %v299
      %v826 = vunpack.c.l.b16 %v300
      %v827 = vunpack.c.h.b16 %v300
      %v828 = vunpack.c.l.b16 %v301
      %v829 = vunpack.c.h.b16 %v301
      %v830 = vunpack.c.l.b16 %v302
      %v831 = vunpack.c.h.b16 %v302
      %v832 = vunpack.c.l.b16 %v303
      %v833 = vunpack.c.h.b16 %v303
      %v834 = vunpack.c.l.b16 %v304
      %v835 = vunpack.c.h.b16 %v304
      %v836 = vunpack.c.l.b16 %v305
      %v837 = vunpack.c.h.b16 %v305
      %v838 = vunpack.c.l.b16 %v306
      %v839 = vunpack.c.h.b16 %v306
      %v840 = vunpack.c.l.b16 %v307
      %v841 = vunpack.c.h.b16 %v307
      %v842 = vunpack.c.l.b16 %v308
      %v843 = vunpack.c.h.b16 %v308
      %v844 = vunpack.c.l.b16 %v309
      %v845 = vunpack.c.h.b16 %v309
      %v846 = vunpack.c.l.b16 %v310
      %v847 = vunpack.c.h.b16 %v310
      %v848 = vunpack.c.l.b16 %v311
      %v849 = vunpack.c.h.b16 %v311
      %v850 = vunpack.c.l.b16 %v312
      %v851 = vunpack.c.h.b16 %v312
      %v852 = vunpack.c.l.b16 %v313
      %v853 = vunpack.c.h.b16 %v313
      %v854 = vunpack.c.l.b16 %v314
      %v855 = vunpack.c.h.b16 %v314
      %v856 = vunpack.c.l.b16 %v315
      %v857 = vunpack.c.h.b16 %v315
      %v858 = vunpack.c.l.b16 %v316
      %v859 = vunpack.c.h.b16 %v316
      %v860 = vunpack.c.l.b16 %v317
      %v861 = vunpack.c.h.b16 %v317
      %v862 = vunpack.c.l.b16 %v318
      %v863 = vunpack.c.h.b16 %v318
      %v864 = vunpack.c.l.b16 %v319
      %v865 = vunpack.c.h.b16 %v319
      %v866 = vunpack.c.l.b16 %v320
      %v867 = vunpack.c.h.b16 %v320
      %v868 = vunpack.c.l.b16 %v321
      %v869 = vunpack.c.h.b16 %v321
      %v870 = vunpack.c.l.b16 %v322
      %v871 = vunpack.c.h.b16 %v322
      %v872 = vunpack.c.l.b16 %v323
      %v873 = vunpack.c.h.b16 %v323
      %v874 = vunpack.c.l.b16 %v324
      %v875 = vunpack.c.h.b16 %v324
      %v876 = vunpack.c.l.b16 %v325
      %v877 = vunpack.c.h.b16 %v325
      %v878 = vunpack.c.l.b16 %v326
      %v879 = vunpack.c.h.b16 %v326
      %v880 = vunpack.c.l.b16 %v327
      %v881 = vunpack.c.h.b16 %v327
      %v882 = vunpack.c.l.b16 %v328
      %v883 = vunpack.c.h.b16 %v328
      %v884 = vunpack.c.l.b16 %v329
      %v885 = vunpack.c.h.b16 %v329
      %v886 = vunpack.c.l.b16 %v330
      %v887 = vunpack.c.h.b16 %v330
      %v888 = vunpack.c.l.b16 %v331
      %v889 = vunpack.c.h.b16 %v331
      %v890 = vunpack.c.l.b16 %v332
      %v891 = vunpack.c.h.b16 %v332
      %v892 = vunpack.c.l.b16 %v333
      %v893 = vunpack.c.h.b16 %v333
      %v894 = vunpack.c.l.b16 %v334
      %v895 = vunpack.c.h.b16 %v334
      %v896 = vunpack.c.l.b16 %v335
      %v897 = vunpack.c.h.b16 %v335
      %v898 = vunpack.c.l.b16 %v336
      %v899 = vunpack.c.h.b16 %v336
      %v900 = vunpack.c.l.b16 %v337
      %v901 = vunpack.c.h.b16 %v337
      %v902 = vunpack.c.l.b16 %v338
      %v903 = vunpack.c.h.b16 %v338
      %v904 = vunpack.c.l.b16 %v339
      %v905 = vunpack.c.h.b16 %v339
      %v906 = vunpack.c.l.b16 %v340
      %v907 = vunpack.c.h.b16 %v340
      %v908 = vunpack.c.l.b16 %v341
      %v909 = vunpack.c.h.b16 %v341
      %v910 = vunpack.c.l.b16 %v342
      %v911 = vunpack.c.h.b16 %v342
      %v912 = vunpack.c.l.b16 %v343
      %v913 = vunpack.c.h.b16 %v343
      %v914 = vunpack.c.l.b16 %v344
      %v915 = vunpack.c.h.b16 %v344
      %v916 = vunpack.c.l.b16 %v345
      %v917 = vunpack.c.h.b16 %v345
      %v918 = vunpack.c.l.b16 %v346
      %v919 = vunpack.c.h.b16 %v346
      %v920 = vunpack.c.l.b16 %v347
      %v921 = vunpack.c.h.b16 %v347
      %v922 = vunpack.c.l.b16 %v348
      %v923 = vunpack.c.h.b16 %v348
      %v924 = vunpack.c.l.b16 %v349
      %v925 = vunpack.c.h.b16 %v349
      %v926 = vunpack.c.l.b16 %v350
      %v927 = vunpack.c.h.b16 %v350
      %v928 = vunpack.c.l.b16 %v351
      %v929 = vunpack.c.h.b16 %v351
      %v930 = vunpack.c.l.b16 %v352
      %v931 = vunpack.c.h.b16 %v352
      %v932 = vunpack.c.l.b16 %v353
      %v933 = vunpack.c.h.b16 %v353
      %v934 = vunpack.c.l.b16 %v354
      %v935 = vunpack.c.h.b16 %v354
      %v936 = vunpack.c.l.b16 %v355
      %v937 = vunpack.c.h.b16 %v355
      %v938 = vunpack.c.l.b16 %v356
      %v939 = vunpack.c.h.b16 %v356
      %v940 = vunpack.c.l.b16 %v357
      %v941 = vunpack.c.h.b16 %v357
      %v942 = vunpack.c.l.b16 %v358
      %v943 = vunpack.c.h.b16 %v358
      %v944 = vunpack.c.l.b16 %v359
      %v945 = vunpack.c.h.b16 %v359
      %v946 = vunpack.c.l.b16 %v360
      %v947 = vunpack.c.h.b16 %v360
      %v948 = vunpack.c.l.b16 %v361
      %v949 = vunpack.c.h.b16 %v361
      %v950 = vunpack.c.l.b16 %v362
      %v951 = vunpack.c.h.b16 %v362
      %v952 = vunpack.c.l.b16 %v363
      %v953 = vunpack.c.h.b16 %v363
      %v954 = vunpack.c.l.b16 %v364
      %v955 = vunpack.c.h.b16 %v364
      %v956 = vunpack.c.l.b16 %v365
      %v957 = vunpack.c.h.b16 %v365
      %v958 = vunpack.c.l.b16 %v366
      %v959 = vunpack.c.h.b16 %v366
      %v960 = vunpack.c.l.b16 %v367
      %v961 = vunpack.c.h.b16 %v367
      %v962 = vunpack.c.l.b16 %v368
      %v963 = vunpack.c.h.b16 %v368
      %v964 = vunpack.c.l.b16 %v369
      %v965 = vunpack.c.h.b16 %v369
      %v966 = vunpack.c.l.b16 %v370
      %v967 = vunpack.c.h.b16 %v370
      %v968 = vunpack.c.l.b16 %v371
      %v969 = vunpack.c.h.b16 %v371
      %v970 = vunpack.c.l.b16 %v372
      %v971 = vunpack.c.h.b16 %v372
      %v972 = vunpack.c.l.b16 %v373
      %v973 = vunpack.c.h.b16 %v373
      %v974 = vunpack.c.l.b16 %v374
      %v975 = vunpack.c.h.b16 %v374
      %v976 = vunpack.c.l.b16 %v375
      %v977 = vunpack.c.h.b16 %v375
      %v978 = vunpack.c.l.b16 %v376
      %v979 = vunpack.c.h.b16 %v376
      %v980 = vunpack.c.l.b16 %v377
      %v981 = vunpack.c.h.b16 %v377
      %v982 = vunpack.c.l.b16 %v378
      %v983 = vunpack.c.h.b16 %v378
      %v984 = vunpack.c.l.b16 %v379
      %v985 = vunpack.c.h.b16 %v379
      %v986 = vunpack.c.l.b16 %v380
      %v987 = vunpack.c.h.b16 %v380
      %v988 = vunpack.c.l.b16 %v381
      %v989 = vunpack.c.h.b16 %v381
      %v990 = vunpack.c.l.b16 %v382
      %v991 = vunpack.c.h.b16 %v382
      %v992 = vunpack.c.l.b16 %v383
      %v993 = vunpack.c.h.b16 %v383
      %v994 = vunpack.c.l.b16 %v384
      %v995 = vunpack.c.h.b16 %v384
      %v996 = vunpack.c.l.b16 %v385
      %v997 = vunpack.c.h.b16 %v385
      %v998 = vunpack.c.l.b16 %v386
      %v999 = vunpack.c.h.b16 %v386
      %v1000 = vunpack.c.l.b16 %v387
      %v1001 = vunpack.c.h.b16 %v387
      %v1002 = vunpack.c.l.b16 %v388
      %v1003 = vunpack.c.h.b16 %v388
      %v1004 = vunpack.c.l.b16 %v389
      %v1005 = vunpack.c.h.b16 %v389
      %v1006 = vunpack.c.l.b16 %v390
      %v1007 = vunpack.c.h.b16 %v390
      %v1008 = vunpack.c.l.b16 %v391
      %v1009 = vunpack.c.h.b16 %v391
      %v1010 = vunpack.c.l.b16 %v392
      %v1011 = vunpack.c.h.b16 %v392
      %v1012 = vunpack.c.l.b16 %v393
      %v1013 = vunpack.c.h.b16 %v393
      %v1014 = vunpack.c.l.b16 %v394
      %v1015 = vunpack.c.h.b16 %v394
      %v1016 = vunpack.c.l.b16 %v395
      %v1017 = vunpack.c.h.b16 %v395
      %v1018 = vunpack.c.l.b16 %v396
      %v1019 = vunpack.c.h.b16 %v396
      %v1020 = vunpack.c.l.b16 %v397
      %v1021 = vunpack.c.h.b16 %v397
      %v1022 = vpack.c.b16 %v740, %v734
      %v1023 = vpack.c.b16 %v741, %v735
      %v1024 = vpack.c.b16 %v742, %v736
      %v1025 = vpack.c.b16 %v743, %v737
      %v1026 = vpack.c.b16 %v744, %v738
      %v1027 = vpack.c.b16 %v745, %v739
      %v1028 = vpack.c.b16 %v752, %v746
      %v1029 = vpack.c.b16 %v753, %v747
      %v1030 = vpack.c.b16 %v754, %v748
      %v1031 = vpack.c.b16 %v755, %v749
      %v1032 = vpack.c.b16 %v756, %v750
      %v1033 = vpack.c.b16 %v757, %v751
      %v1034 = vpack.c.b16 %v764, %v758
      %v1035 = vpack.c.b16 %v765, %v759
      %v1036 = vpack.c.b16 %v766, %v760
      %v1037 = vpack.c.b16 %v767, %v761
      %v1038 = vpack.c.b16 %v768, %v762
      %v1039 = vpack.c.b16 %v769, %v763
      %v1040 = vpack.c.b16 %v776, %v770
      %v1041 = vpack.c.b16 %v777, %v771
      %v1042 = vpack.c.b16 %v778, %v772
      %v1043 = vpack.c.b16 %v779, %v773
      %v1044 = vpack.c.b16 %v780, %v774
      %v1045 = vpack.c.b16 %v781, %v775
      %v1046 = vpack.c.b16 %v788, %v782
      %v1047 = vpack.c.b16 %v789, %v783
      %v1048 = vpack.c.b16 %v790, %v784
      %v1049 = vpack.c.b16 %v791, %v785
      %v1050 = vpack.c.b16 %v792, %v786
      %v1051 = vpack.c.b16 %v793, %v787
      %v1052 = vpack.c.b16 %v800, %v794
      %v1053 = vpack.c.b16 %v801, %v795
      %v1054 = vpack.c.b16 %v802, %v796
      %v1055 = vpack.c.b16 %v803, %v797
      %v1056 = vpack.c.b16 %v804, %v798
      %v1057 = vpack.c.b16 %v805, %v799
      %v1058 = vpack.c.b16 %v812, %v806
      %v1059 = vpack.c.b16 %v813, %v807
      %v1060 = vpack.c.b16 %v814, %v808
      %v1061 = vpack.c.b16 %v815, %v809
      %v1062 = vpack.c.b16 %v816, %v810
      %v1063 = vpack.c.b16 %v817, %v811
      %v1064 = vpack.c.b16 %v824, %v818
      %v1065 = vpack.c.b16 %v825, %v819
      %v1066 = vpack.c.b16 %v826, %v820
      %v1067 = vpack.c.b16 %v827, %v821
      %v1068 = vpack.c.b16 %v828, %v822
      %v1069 = vpack.c.b16 %v829, %v823
      %v1070 = vpack.c.b16 %v836, %v830
      %v1071 = vpack.c.b16 %v837, %v831
      %v1072 = vpack.c.b16 %v838, %v832
      %v1073 = vpack.c.b16 %v839, %v833
      %v1074 = vpack.c.b16 %v840, %v834
      %v1075 = vpack.c.b16 %v841, %v835
      %v1076 = vpack.c.b16 %v848, %v842
      %v1077 = vpack.c.b16 %v849, %v843
      %v1078 = vpack.c.b16 %v850, %v844
      %v1079 = vpack.c.b16 %v851, %v845
      %v1080 = vpack.c.b16 %v852, %v846
      %v1081 = vpack.c.b16 %v853, %v847
      %v1082 = vpack.c.b16 %v860, %v854
      %v1083 = vpack.c.b16 %v861, %v855
      %v1084 = vpack.c.b16 %v862, %v856
      %v1085 = vpack.c.b16 %v863, %v857
      %v1086 = vpack.c.b16 %v864, %v858
      %v1087 = vpack.c.b16 %v865, %v859
      %v1088 = vpack.c.b16 %v872, %v866
      %v1089 = vpack.c.b16 %v873, %v867
      %v1090 = vpack.c.b16 %v874, %v868
      %v1091 = vpack.c.b16 %v875, %v869
      %v1092 = vpack.c.b16 %v876, %v870
      %v1093 = vpack.c.b16 %v877, %v871
      %v1094 = vpack.c.b16 %v884, %v878
      %v1095 = vpack.c.b16 %v885, %v879
      %v1096 = vpack.c.b16 %v886, %v880
      %v1097 = vpack.c.b16 %v887, %v881
      %v1098 = vpack.c.b16 %v888, %v882
      %v1099 = vpack.c.b16 %v889, %v883
      %v1100 = vpack.c.b16 %v896, %v890
      %v1101 = vpack.c.b16 %v897, %v891
      %v1102 = vpack.c.b16 %v898, %v892
      %v1103 = vpack.c.b16 %v899, %v893
      %v1104 = vpack.c.b16 %v900, %v894
      %v1105 = vpack.c.b16 %v901, %v895
      %v1106 = vpack.c.b16 %v908, %v902
      %v1107 = vpack.c.b16 %v909, %v903
      %v1108 = vpack.c.b16 %v910, %v904
      %v1109 = vpack.c.b16 %v911, %v905
      %v1110 = vpack.c.b16 %v912, %v906
      %v1111 = vpack.c.b16 %v913, %v907
      %v1112 = vpack.c.b16 %v920, %v914
      %v1113 = vpack.c.b16 %v921, %v915
      %v1114 = vpack.c.b16 %v922, %v916
      %v1115 = vpack.c.b16 %v923, %v917
      %v1116 = vpack.c.b16 %v924, %v918
      %v1117 = vpack.c.b16 %v925, %v919
      %v1118 = vpack.c.b16 %v932, %v926
      %v1119 = vpack.c.b16 %v933, %v927
      %v1120 = vpack.c.b16 %v934, %v928
      %v1121 = vpack.c.b16 %v935, %v929
      %v1122 = vpack.c.b16 %v936, %v930
      %v1123 = vpack.c.b16 %v937, %v931
      %v1124 = vpack.c.b16 %v944, %v938
      %v1125 = vpack.c.b16 %v945, %v939
      %v1126 = vpack.c.b16 %v946, %v940
      %v1127 = vpack.c.b16 %v947, %v941
      %v1128 = vpack.c.b16 %v948, %v942
      %v1129 = vpack.c.b16 %v949, %v943
      %v1130 = vpack.c.b16 %v956, %v950
      %v1131 = vpack.c.b16 %v957, %v951
      %v1132 = vpack.c.b16 %v958, %v952
      %v1133 = vpack.c.b16 %v959, %v953
      %v1134 = vpack.c.b16 %v960, %v954
      %v1135 = vpack.c.b16 %v961, %v955
      %v1136 = vpack.c.b16 %v968, %v962
      %v1137 = vpack.c.b16 %v969, %v963
      %v1138 = vpack.c.b16 %v970, %v964
      %v1139 = vpack.c.b16 %v971, %v965
      %v1140 = vpack.c.b16 %v972, %v966
      %v1141 = vpack.c.b16 %v973, %v967
      %v1142 = vpack.c.b16 %v980, %v974
      %v1143 = vpack.c.b16 %v981, %v975
      %v1144 = vpack.c.b16 %v982, %v976
      %v1145 = vpack.c.b16 %v983, %v977
      %v1146 = vpack.c.b16 %v984, %v978
      %v1147 = vpack.c.b16 %v985, %v979
      %v1148 = vpack.c.b16 %v992, %v986
      %v1149 = vpack.c.b16 %v993, %v987
      %v1150 = vpack.c.b16 %v994, %v988
      %v1151 = vpack.c.b16 %v995, %v989
      %v1152 = vpack.c.b16 %v996, %v990
      %v1153 = vpack.c.b16 %v997, %v991
      %v1154 = vpack.c.b16 %v1004, %v998
      %v1155 = vpack.c.b16 %v1005, %v999
      %v1156 = vpack.c.b16 %v1006, %v1000
      %v1157 = vpack.c.b16 %v1007, %v1001
      %v1158 = vpack.c.b16 %v1008, %v1002
      %v1159 = vpack.c.b16 %v1009, %v1003
      %v1160 = vpack.c.b16 %v1016, %v1010
      %v1161 = vpack.c.b16 %v1017, %v1011
      %v1162 = vpack.c.b16 %v1018, %v1012
      %v1163 = vpack.c.b16 %v1019, %v1013
      %v1164 = vpack.c.b16 %v1020, %v1014
      %v1165 = vpack.c.b16 %v1021, %v1015
      %v1406 = vunpack.c.l.b16 %v398
      %v1407 = vunpack.c.l.b16 %v399
      %v1408 = vunpack.c.l.b16 %v400
      %v1409 = vunpack.c.l.b16 %v401
      %v1410 = vunpack.c.l.b16 %v402
      %v1411 = vunpack.c.l.b16 %v403
      %v1412 = vunpack.c.l.b16 %v404
      %v1413 = vunpack.c.l.b16 %v405
      %v1414 = vunpack.c.l.b16 %v406
      %v1415 = vunpack.c.l.b16 %v407
      %v1416 = vunpack.c.l.b16 %v408
      %v1417 = vunpack.c.l.b16 %v409
      %v1418 = vunpack.c.l.b16 %v410
      %v1419 = vunpack.c.l.b16 %v411
      %v1420 = vunpack.c.l.b16 %v412
      %v1421 = vunpack.c.l.b16 %v413
      %v1422 = vunpack.c.l.b16 %v414
      %v1423 = vunpack.c.l.b16 %v415
      %v1424 = vunpack.c.l.b16 %v416
      %v1425 = vunpack.c.l.b16 %v417
      %v1426 = vunpack.c.l.b16 %v418
      %v1427 = vunpack.c.l.b16 %v419
      %v1428 = vunpack.c.l.b16 %v420
      %v1429 = vunpack.c.l.b16 %v421
      %v1430 = vunpack.c.l.b16 %v422
      %v1431 = vunpack.c.l.b16 %v423
      %v1432 = vunpack.c.l.b16 %v424
      %v1433 = vunpack.c.l.b16 %v425
      %v1434 = vunpack.c.l.b16 %v426
      %v1435 = vunpack.c.l.b16 %v427
      %v1436 = vunpack.c.l.b16 %v428
      %v1437 = vunpack.c.l.b16 %v429
      %v1438 = vunpack.c.l.b16 %v430
      %v1439 = vunpack.c.l.b16 %v431
      %v1440 = vunpack.c.l.b16 %v432
      %v1441 = vunpack.c.l.b16 %v433
      %v1442 = vunpack.c.l.b16 %v434
      %v1443 = vunpack.c.l.b16 %v435
      %v1444 = vunpack.c.l.b16 %v436
      %v1445 = vunpack.c.l.b16 %v437
      %v1446 = vunpack.c.l.b16 %v438
      %v1447 = vunpack.c.l.b16 %v439
      %v1448 = vunpack.c.l.b16 %v440
      %v1449 = vunpack.c.l.b16 %v441
      %v1450 = vunpack.c.l.b16 %v442
      %v1451 = vunpack.c.l.b16 %v443
      %v1452 = vunpack.c.l.b16 %v444
      %v1453 = vunpack.c.l.b16 %v445
      %v1454 = vunpack.c.l.b16 %v446
      %v1455 = vunpack.c.l.b16 %v447
      %v1456 = vunpack.c.l.b16 %v448
      %v1457 = vunpack.c.l.b16 %v449
      %v1458 = vunpack.c.l.b16 %v450
      %v1459 = vunpack.c.l.b16 %v451
      %v1460 = vunpack.c.l.b16 %v452
      %v1461 = vunpack.c.l.b16 %v453
      %v1462 = vunpack.c.l.b16 %v454
      %v1463 = vunpack.c.l.b16 %v455
      %v1464 = vunpack.c.l.b16 %v456
      %v1465 = vunpack.c.l.b16 %v457
      %v1466 = vunpack.c.l.b16 %v458
      %v1467 = vunpack.c.l.b16 %v459
      %v1468 = vunpack.c.l.b16 %v460
      %v1469 = vunpack.c.l.b16 %v461
      %v1470 = vunpack.c.l.b16 %v462
      %v1471 = vunpack.c.l.b16 %v463
      %v1472 = vunpack.c.l.b16 %v464
      %v1473 = vunpack.c.l.b16 %v465
      %v1474 = vunpack.c.l.b16 %v466
      %v1475 = vunpack.c.l.b16 %v467
      %v1476 = vunpack.c.l.b16 %v468
      %v1477 = vunpack.c.l.b16 %v469
      %v1478 = vunpack.c.l.b16 %v470
      %v1479 = vunpack.c.l.b16 %v471
      %v1480 = vunpack.c.l.b16 %v472
      %v1481 = vunpack.c.l.b16 %v473
      %v1482 = vunpack.c.l.b16 %v474
      %v1483 = vunpack.c.l.b16 %v475
      %v1484 = vunpack.c.l.b16 %v476
      %v1485 = vunpack.c.l.b16 %v477
      %v1486 = vunpack.c.l.b16 %v478
      %v1487 = vunpack.c.l.b16 %v479
      %v1488 = vunpack.c.l.b16 %v480
      %v1489 = vunpack.c.l.b16 %v481
      %v1490 = vunpack.c.l.b16 %v482
      %v1491 = vunpack.c.l.b16 %v483
      %v1492 = vunpack.c.l.b16 %v484
      %v1493 = vunpack.c.l.b16 %v485
      %v1494 = vunpack.c.l.b16 %v486
      %v1495 = vunpack.c.l.b16 %v487
      %v1496 = vunpack.c.l.b16 %v488
      %v1497 = vunpack.c.l.b16 %v489
      %v1498 = vunpack.c.l.b16 %v490
      %v1499 = vunpack.c.l.b16 %v491
      %v1500 = vunpack.c.l.b16 %v492
      %v1501 = vunpack.c.l.b16 %v493
      %v1502 = vpack.c.b16 %v1407, %v1406
      %v1503 = vpack.c.b16 %v1409, %v1408
      %v1504 = vpack.c.b16 %v1411, %v1410
      %v1505 = vpack.c.b16 %v1413, %v1412
      %v1506 = vpack.c.b16 %v1415, %v1414
      %v1507 = vpack.c.b16 %v1417, %v1416
      %v1508 = vpack.c.b16 %v1419, %v1418
      %v1509 = vpack.c.b16 %v1421, %v1420
      %v1510 = vpack.c.b16 %v1423, %v1422
      %v1511 = vpack.c.b16 %v1425, %v1424
      %v1512 = vpack.c.b16 %v1427, %v1426
      %v1513 = vpack.c.b16 %v1429, %v1428
      %v1514 = vpack.c.b16 %v1431, %v1430
      %v1515 = vpack.c.b16 %v1433, %v1432
      %v1516 = vpack.c.b16 %v1435, %v1434
      %v1517 = vpack.c.b16 %v1437, %v1436
      %v1518 = vpack.c.b16 %v1439, %v1438
      %v1519 = vpack.c.b16 %v1441, %v1440
      %v1520 = vpack.c.b16 %v1443, %v1442
      %v1521 = vpack.c.b16 %v1445, %v1444
      %v1522 = vpack.c.b16 %v1447, %v1446
      %v1523 = vpack.c.b16 %v1449, %v1448
      %v1524 = vpack.c.b16 %v1451, %v1450
      %v1525 = vpack.c.b16 %v1453, %v1452
      %v1526 = vpack.c.b16 %v1455, %v1454
      %v1527 = vpack.c.b16 %v1457, %v1456
      %v1528 = vpack.c.b16 %v1459, %v1458
      %v1529 = vpack.c.b16 %v1461, %v1460
      %v1530 = vpack.c.b16 %v1463, %v1462
      %v1531 = vpack.c.b16 %v1465, %v1464
      %v1532 = vpack.c.b16 %v1467, %v1466
      %v1533 = vpack.c.b16 %v1469, %v1468
      %v1534 = vpack.c.b16 %v1471, %v1470
      %v1535 = vpack.c.b16 %v1473, %v1472
      %v1536 = vpack.c.b16 %v1475, %v1474
      %v1537 = vpack.c.b16 %v1477, %v1476
      %v1538 = vpack.c.b16 %v1479, %v1478
      %v1539 = vpack.c.b16 %v1481, %v1480
      %v1540 = vpack.c.b16 %v1483, %v1482
      %v1541 = vpack.c.b16 %v1485, %v1484
      %v1542 = vpack.c.b16 %v1487, %v1486
      %v1543 = vpack.c.b16 %v1489, %v1488
      %v1544 = vpack.c.b16 %v1491, %v1490
      %v1545 = vpack.c.b16 %v1493, %v1492
      %v1546 = vpack.c.b16 %v1495, %v1494
      %v1547 = vpack.c.b16 %v1497, %v1496
      %v1548 = vpack.c.b16 %v1499, %v1498
      %v1549 = vpack.c.b16 %v1501, %v1500
      %1598 = vmatprep.subr.bf16.mxu0 0
      %1599 = vmatpush1.bf16.msra.mxu0 %v1502
      %1600 = vmatprep.subr.bf16.mxu0 0
      %1601 = vmatpush1.bf16.msra.mxu0 %v1503
      %1602 = vmatprep.subr.bf16.mxu0 0
      %1603 = vmatpush1.bf16.msra.mxu0 %v1504
      %1604 = vmatprep.subr.bf16.mxu0 0
      %1605 = vmatpush1.bf16.msra.mxu0 %v1505
      %1606 = vmatprep.subr.bf16.mxu0 0
      %1607 = vmatpush1.bf16.msra.mxu0 %v1506
      %1608 = vmatprep.subr.bf16.mxu0 0
      %1609 = vmatpush1.bf16.msra.mxu0 %v1507
      %1610 = vmatprep.subr.bf16.mxu0 0
      %1611 = vmatpush1.bf16.msra.mxu0 %v1508
      %1612 = vmatprep.subr.bf16.mxu0 0
      %1613 = vmatpush1.bf16.msra.mxu0 %v1509
      %1614 = vmatprep.subr.bf16.mxu0 0
      %1615 = vmatpush1.bf16.msra.mxu0 %v1510
      %1616 = vmatprep.subr.bf16.mxu0 0
      %1617 = vmatpush1.bf16.msra.mxu0 %v1511
      %1618 = vmatprep.subr.bf16.mxu0 0
      %1619 = vmatpush1.bf16.msra.mxu0 %v1512
      %1620 = vmatprep.subr.bf16.mxu0 0
      %1621 = vmatpush1.bf16.msra.mxu0 %v1513
      %1622 = vmatprep.subr.bf16.mxu0 0
      %1623 = vmatpush1.bf16.msra.mxu0 %v1514
      %1624 = vmatprep.subr.bf16.mxu0 0
      %1625 = vmatpush1.bf16.msra.mxu0 %v1515
      %1626 = vmatprep.subr.bf16.mxu0 0
      %1627 = vmatpush1.bf16.msra.mxu0 %v1516
      %1628 = vmatprep.subr.bf16.mxu0 0
      %1629 = vmatpush1.bf16.msra.mxu0 %v1517
      %1630 = vmatprep.mubr.bf16.mxu0 %v1023
      %1631 = vmatmul.mubr.bf16.gmra.mrb[0].mxu0 %v1022
      %v1632 = vpop.f32.mrb[0].mxu0
      %v1633 = vadd.f32 %v542, %v1632
      %v1634 = vpop.f32.mrb[0].mxu0
      %v1635 = vpop.f32.mrb[0].mxu0
      %v1636 = vadd.f32 %v543, %v1635
      %v1637 = vpop.f32.mrb[0].mxu0
      %1638 = vmatprep.mubr.bf16.mxu0 %v1029
      %1639 = vmatmul.mubr.bf16.gmra.mrb[0].mxu0 %v1028
      %v1640 = vpop.f32.mrb[0].mxu0
      %v1641 = vadd.f32 %v544, %v1640
      %v1642 = vpop.f32.mrb[0].mxu0
      %v1643 = vpop.f32.mrb[0].mxu0
      %v1644 = vadd.f32 %v545, %v1643
      %v1645 = vpop.f32.mrb[0].mxu0
      %1646 = vmatprep.mubr.bf16.mxu0 %v1035
      %1647 = vmatmul.mubr.bf16.gmra.mrb[0].mxu0 %v1034
      %v1648 = vpop.f32.mrb[0].mxu0
      %v1649 = vadd.f32 %v546, %v1648
      %v1650 = vpop.f32.mrb[0].mxu0
      %v1651 = vpop.f32.mrb[0].mxu0
      %v1652 = vadd.f32 %v547, %v1651
      %v1653 = vpop.f32.mrb[0].mxu0
      %1654 = vmatprep.mubr.bf16.mxu0 %v1041
      %1655 = vmatmul.mubr.bf16.gmra.mrb[0].mxu0 %v1040
      %v1656 = vpop.f32.mrb[0].mxu0
      %v1657 = vadd.f32 %v548, %v1656
      %v1658 = vpop.f32.mrb[0].mxu0
      %v1659 = vpop.f32.mrb[0].mxu0
      %v1660 = vadd.f32 %v549, %v1659
      %v1661 = vpop.f32.mrb[0].mxu0
      %1662 = vmatprep.mubr.bf16.mxu0 %v1047
      %1663 = vmatmul.mubr.bf16.gmra.mrb[0].mxu0 %v1046
      %v1664 = vpop.f32.mrb[0].mxu0
      %v1665 = vadd.f32 %v550, %v1664
      %v1666 = vpop.f32.mrb[0].mxu0
      %v1667 = vpop.f32.mrb[0].mxu0
      %v1668 = vadd.f32 %v551, %v1667
      %v1669 = vpop.f32.mrb[0].mxu0
      %1670 = vmatprep.mubr.bf16.mxu0 %v1053
      %1671 = vmatmul.mubr.bf16.gmra.mrb[0].mxu0 %v1052
      %v1672 = vpop.f32.mrb[0].mxu0
      %v1673 = vadd.f32 %v552, %v1672
      %v1674 = vpop.f32.mrb[0].mxu0
      %v1675 = vpop.f32.mrb[0].mxu0
      %v1676 = vadd.f32 %v553, %v1675
      %v1677 = vpop.f32.mrb[0].mxu0
      %1678 = vmatprep.mubr.bf16.mxu0 %v1059
      %1679 = vmatmul.mubr.bf16.gmra.mrb[0].mxu0 %v1058
      %v1680 = vpop.f32.mrb[0].mxu0
      %v1681 = vadd.f32 %v554, %v1680
      %v1682 = vpop.f32.mrb[0].mxu0
      %v1683 = vpop.f32.mrb[0].mxu0
      %v1684 = vadd.f32 %v555, %v1683
      %v1685 = vpop.f32.mrb[0].mxu0
      %1686 = vmatprep.mubr.bf16.mxu0 %v1065
      %1687 = vmatmul.mubr.bf16.gmra.mrb[0].mxu0 %v1064
      %v1688 = vpop.f32.mrb[0].mxu0
      %v1689 = vadd.f32 %v556, %v1688
      %v1690 = vpop.f32.mrb[0].mxu0
      %v1691 = vpop.f32.mrb[0].mxu0
      %v1692 = vadd.f32 %v557, %v1691
      %v1693 = vpop.f32.mrb[0].mxu0
      %1694 = vmatprep.mubr.bf16.mxu0 %v1071
      %1695 = vmatmul.mubr.bf16.gmra.mrb[0].mxu0 %v1070
      %v1696 = vpop.f32.mrb[0].mxu0
      %v1697 = vadd.f32 %v558, %v1696
      %v1698 = vpop.f32.mrb[0].mxu0
      %v1699 = vpop.f32.mrb[0].mxu0
      %v1700 = vadd.f32 %v559, %v1699
      %v1701 = vpop.f32.mrb[0].mxu0
      %1702 = vmatprep.mubr.bf16.mxu0 %v1077
      %1703 = vmatmul.mubr.bf16.gmra.mrb[0].mxu0 %v1076
      %v1704 = vpop.f32.mrb[0].mxu0
      %v1705 = vadd.f32 %v560, %v1704
      %v1706 = vpop.f32.mrb[0].mxu0
      %v1707 = vpop.f32.mrb[0].mxu0
      %v1708 = vadd.f32 %v561, %v1707
      %v1709 = vpop.f32.mrb[0].mxu0
      %1710 = vmatprep.mubr.bf16.mxu0 %v1083
      %1711 = vmatmul.mubr.bf16.gmra.mrb[0].mxu0 %v1082
      %v1712 = vpop.f32.mrb[0].mxu0
      %v1713 = vadd.f32 %v562, %v1712
      %v1714 = vpop.f32.mrb[0].mxu0
      %v1715 = vpop.f32.mrb[0].mxu0
      %v1716 = vadd.f32 %v563, %v1715
      %v1717 = vpop.f32.mrb[0].mxu0
      %1718 = vmatprep.mubr.bf16.mxu0 %v1089
      %1719 = vmatmul.mubr.bf16.gmra.mrb[0].mxu0 %v1088
      %v1720 = vpop.f32.mrb[0].mxu0
      %v1721 = vadd.f32 %v564, %v1720
      %v1722 = vpop.f32.mrb[0].mxu0
      %v1723 = vpop.f32.mrb[0].mxu0
      %v1724 = vadd.f32 %v565, %v1723
      %v1725 = vpop.f32.mrb[0].mxu0
      %1726 = vmatprep.mubr.bf16.mxu0 %v1095
      %1727 = vmatmul.mubr.bf16.gmra.mrb[0].mxu0 %v1094
      %v1728 = vpop.f32.mrb[0].mxu0
      %v1729 = vadd.f32 %v566, %v1728
      %v1730 = vpop.f32.mrb[0].mxu0
      %v1731 = vpop.f32.mrb[0].mxu0
      %v1732 = vadd.f32 %v567, %v1731
      %v1733 = vpop.f32.mrb[0].mxu0
      %1734 = vmatprep.mubr.bf16.mxu0 %v1101
      %1735 = vmatmul.mubr.bf16.gmra.mrb[0].mxu0 %v1100
      %v1736 = vpop.f32.mrb[0].mxu0
      %v1737 = vadd.f32 %v568, %v1736
      %v1738 = vpop.f32.mrb[0].mxu0
      %v1739 = vpop.f32.mrb[0].mxu0
      %v1740 = vadd.f32 %v569, %v1739
      %v1741 = vpop.f32.mrb[0].mxu0
      %1742 = vmatprep.mubr.bf16.mxu0 %v1107
      %1743 = vmatmul.mubr.bf16.gmra.mrb[0].mxu0 %v1106
      %v1744 = vpop.f32.mrb[0].mxu0
      %v1745 = vadd.f32 %v570, %v1744
      %v1746 = vpop.f32.mrb[0].mxu0
      %v1747 = vpop.f32.mrb[0].mxu0
      %v1748 = vadd.f32 %v571, %v1747
      %v1749 = vpop.f32.mrb[0].mxu0
      %1750 = vmatprep.mubr.bf16.mxu0 %v1113
      %1751 = vmatmul.mubr.bf16.gmra.mrb[0].mxu0 %v1112
      %v1752 = vpop.f32.mrb[0].mxu0
      %v1753 = vadd.f32 %v572, %v1752
      %v1754 = vpop.f32.mrb[0].mxu0
      %v1755 = vpop.f32.mrb[0].mxu0
      %v1756 = vadd.f32 %v573, %v1755
      %v1757 = vpop.f32.mrb[0].mxu0
      %1758 = vmatprep.mubr.bf16.mxu0 %v1119
      %1759 = vmatmul.mubr.bf16.gmra.mrb[0].mxu0 %v1118
      %v1760 = vpop.f32.mrb[0].mxu0
      %v1761 = vadd.f32 %v574, %v1760
      %v1762 = vpop.f32.mrb[0].mxu0
      %v1763 = vpop.f32.mrb[0].mxu0
      %v1764 = vadd.f32 %v575, %v1763
      %v1765 = vpop.f32.mrb[0].mxu0
      %1766 = vmatprep.mubr.bf16.mxu0 %v1125
      %1767 = vmatmul.mubr.bf16.gmra.mrb[0].mxu0 %v1124
      %v1768 = vpop.f32.mrb[0].mxu0
      %v1769 = vadd.f32 %v576, %v1768
      %v1770 = vpop.f32.mrb[0].mxu0
      %v1771 = vpop.f32.mrb[0].mxu0
      %v1772 = vadd.f32 %v577, %v1771
      %v1773 = vpop.f32.mrb[0].mxu0
      %1774 = vmatprep.mubr.bf16.mxu0 %v1131
      %1775 = vmatmul.mubr.bf16.gmra.mrb[0].mxu0 %v1130
      %v1776 = vpop.f32.mrb[0].mxu0
      %v1777 = vadd.f32 %v578, %v1776
      %v1778 = vpop.f32.mrb[0].mxu0
      %v1779 = vpop.f32.mrb[0].mxu0
      %v1780 = vadd.f32 %v579, %v1779
      %v1781 = vpop.f32.mrb[0].mxu0
      %1782 = vmatprep.mubr.bf16.mxu0 %v1137
      %1783 = vmatmul.mubr.bf16.gmra.mrb[0].mxu0 %v1136
      %v1784 = vpop.f32.mrb[0].mxu0
      %v1785 = vadd.f32 %v580, %v1784
      %v1786 = vpop.f32.mrb[0].mxu0
      %v1787 = vpop.f32.mrb[0].mxu0
      %v1788 = vadd.f32 %v581, %v1787
      %v1789 = vpop.f32.mrb[0].mxu0
      %1790 = vmatprep.mubr.bf16.mxu0 %v1143
      %1791 = vmatmul.mubr.bf16.gmra.mrb[0].mxu0 %v1142
      %v1792 = vpop.f32.mrb[0].mxu0
      %v1793 = vadd.f32 %v582, %v1792
      %v1794 = vpop.f32.mrb[0].mxu0
      %v1795 = vpop.f32.mrb[0].mxu0
      %v1796 = vadd.f32 %v583, %v1795
      %v1797 = vpop.f32.mrb[0].mxu0
      %1798 = vmatprep.mubr.bf16.mxu0 %v1149
      %1799 = vmatmul.mubr.bf16.gmra.mrb[0].mxu0 %v1148
      %v1800 = vpop.f32.mrb[0].mxu0
      %v1801 = vadd.f32 %v584, %v1800
      %v1802 = vpop.f32.mrb[0].mxu0
      %v1803 = vpop.f32.mrb[0].mxu0
      %v1804 = vadd.f32 %v585, %v1803
      %v1805 = vpop.f32.mrb[0].mxu0
      %1806 = vmatprep.mubr.bf16.mxu0 %v1155
      %1807 = vmatmul.mubr.bf16.gmra.mrb[0].mxu0 %v1154
      %v1808 = vpop.f32.mrb[0].mxu0
      %v1809 = vadd.f32 %v586, %v1808
      %v1810 = vpop.f32.mrb[0].mxu0
      %v1811 = vpop.f32.mrb[0].mxu0
      %v1812 = vadd.f32 %v587, %v1811
      %v1813 = vpop.f32.mrb[0].mxu0
      %1814 = vmatprep.mubr.bf16.mxu0 %v1161
      %1815 = vmatmul.mubr.bf16.gmra.mrb[0].mxu0 %v1160
      %v1816 = vpop.f32.mrb[0].mxu0
      %v1817 = vadd.f32 %v588, %v1816
      %v1818 = vpop.f32.mrb[0].mxu0
      %v1819 = vpop.f32.mrb[0].mxu0
      %v1820 = vadd.f32 %v589, %v1819
      %v1821 = vpop.f32.mrb[0].mxu0
      %1822 = vdwg.mxu0
      %1823 = vmatprep.subr.bf16.mxu0 0
      %1824 = vmatpush1.bf16.msra.mxu0 %v1518
      %1825 = vmatprep.subr.bf16.mxu0 0
      %1826 = vmatpush1.bf16.msra.mxu0 %v1519
      %1827 = vmatprep.subr.bf16.mxu0 0
      %1828 = vmatpush1.bf16.msra.mxu0 %v1520
      %1829 = vmatprep.subr.bf16.mxu0 0
      %1830 = vmatpush1.bf16.msra.mxu0 %v1521
      %1831 = vmatprep.subr.bf16.mxu0 0
      %1832 = vmatpush1.bf16.msra.mxu0 %v1522
      %1833 = vmatprep.subr.bf16.mxu0 0
      %1834 = vmatpush1.bf16.msra.mxu0 %v1523
      %1835 = vmatprep.subr.bf16.mxu0 0
      %1836 = vmatpush1.bf16.msra.mxu0 %v1524
      %1837 = vmatprep.subr.bf16.mxu0 0
      %1838 = vmatpush1.bf16.msra.mxu0 %v1525
      %1839 = vmatprep.subr.bf16.mxu0 0
      %1840 = vmatpush1.bf16.msra.mxu0 %v1526
      %1841 = vmatprep.subr.bf16.mxu0 0
      %1842 = vmatpush1.bf16.msra.mxu0 %v1527
      %1843 = vmatprep.subr.bf16.mxu0 0
      %1844 = vmatpush1.bf16.msra.mxu0 %v1528
      %1845 = vmatprep.subr.bf16.mxu0 0
      %1846 = vmatpush1.bf16.msra.mxu0 %v1529
      %1847 = vmatprep.subr.bf16.mxu0 0
      %1848 = vmatpush1.bf16.msra.mxu0 %v1530
      %1849 = vmatprep.subr.bf16.mxu0 0
      %1850 = vmatpush1.bf16.msra.mxu0 %v1531
      %1851 = vmatprep.subr.bf16.mxu0 0
      %1852 = vmatpush1.bf16.msra.mxu0 %v1532
      %1853 = vmatprep.subr.bf16.mxu0 0
      %1854 = vmatpush1.bf16.msra.mxu0 %v1533
      %1855 = vmatprep.mubr.bf16.mxu0 %v1025
      %1856 = vmatmul.mubr.bf16.gmra.mrb[0].mxu0 %v1024
      %v1857 = vpop.f32.mrb[0].mxu0
      %v1858 = vadd.f32 %v1633, %v1857
      %v1859 = vpop.f32.mrb[0].mxu0
      %v1860 = vpop.f32.mrb[0].mxu0
      %v1861 = vadd.f32 %v1636, %v1860
      %v1862 = vpop.f32.mrb[0].mxu0
      %1863 = vmatprep.mubr.bf16.mxu0 %v1031
      %1864 = vmatmul.mubr.bf16.gmra.mrb[0].mxu0 %v1030
      %v1865 = vpop.f32.mrb[0].mxu0
      %v1866 = vadd.f32 %v1641, %v1865
      %v1867 = vpop.f32.mrb[0].mxu0
      %v1868 = vpop.f32.mrb[0].mxu0
      %v1869 = vadd.f32 %v1644, %v1868
      %v1870 = vpop.f32.mrb[0].mxu0
      %1871 = vmatprep.mubr.bf16.mxu0 %v1037
      %1872 = vmatmul.mubr.bf16.gmra.mrb[0].mxu0 %v1036
      %v1873 = vpop.f32.mrb[0].mxu0
      %v1874 = vadd.f32 %v1649, %v1873
      %v1875 = vpop.f32.mrb[0].mxu0
      %v1876 = vpop.f32.mrb[0].mxu0
      %v1877 = vadd.f32 %v1652, %v1876
      %v1878 = vpop.f32.mrb[0].mxu0
      %1879 = vmatprep.mubr.bf16.mxu0 %v1043
      %1880 = vmatmul.mubr.bf16.gmra.mrb[0].mxu0 %v1042
      %v1881 = vpop.f32.mrb[0].mxu0
      %v1882 = vadd.f32 %v1657, %v1881
      %v1883 = vpop.f32.mrb[0].mxu0
      %v1884 = vpop.f32.mrb[0].mxu0
      %v1885 = vadd.f32 %v1660, %v1884
      %v1886 = vpop.f32.mrb[0].mxu0
      %1887 = vmatprep.mubr.bf16.mxu0 %v1049
      %1888 = vmatmul.mubr.bf16.gmra.mrb[0].mxu0 %v1048
      %v1889 = vpop.f32.mrb[0].mxu0
      %v1890 = vadd.f32 %v1665, %v1889
      %v1891 = vpop.f32.mrb[0].mxu0
      %v1892 = vpop.f32.mrb[0].mxu0
      %v1893 = vadd.f32 %v1668, %v1892
      %v1894 = vpop.f32.mrb[0].mxu0
      %1895 = vmatprep.mubr.bf16.mxu0 %v1055
      %1896 = vmatmul.mubr.bf16.gmra.mrb[0].mxu0 %v1054
      %v1897 = vpop.f32.mrb[0].mxu0
      %v1898 = vadd.f32 %v1673, %v1897
      %v1899 = vpop.f32.mrb[0].mxu0
      %v1900 = vpop.f32.mrb[0].mxu0
      %v1901 = vadd.f32 %v1676, %v1900
      %v1902 = vpop.f32.mrb[0].mxu0
      %1903 = vmatprep.mubr.bf16.mxu0 %v1061
      %1904 = vmatmul.mubr.bf16.gmra.mrb[0].mxu0 %v1060
      %v1905 = vpop.f32.mrb[0].mxu0
      %v1906 = vadd.f32 %v1681, %v1905
      %v1907 = vpop.f32.mrb[0].mxu0
      %v1908 = vpop.f32.mrb[0].mxu0
      %v1909 = vadd.f32 %v1684, %v1908
      %v1910 = vpop.f32.mrb[0].mxu0
      %1911 = vmatprep.mubr.bf16.mxu0 %v1067
      %1912 = vmatmul.mubr.bf16.gmra.mrb[0].mxu0 %v1066
      %v1913 = vpop.f32.mrb[0].mxu0
      %v1914 = vadd.f32 %v1689, %v1913
      %v1915 = vpop.f32.mrb[0].mxu0
      %v1916 = vpop.f32.mrb[0].mxu0
      %v1917 = vadd.f32 %v1692, %v1916
      %v1918 = vpop.f32.mrb[0].mxu0
      %1919 = vmatprep.mubr.bf16.mxu0 %v1073
      %1920 = vmatmul.mubr.bf16.gmra.mrb[0].mxu0 %v1072
      %v1921 = vpop.f32.mrb[0].mxu0
      %v1922 = vadd.f32 %v1697, %v1921
      %v1923 = vpop.f32.mrb[0].mxu0
      %v1924 = vpop.f32.mrb[0].mxu0
      %v1925 = vadd.f32 %v1700, %v1924
      %v1926 = vpop.f32.mrb[0].mxu0
      %1927 = vmatprep.mubr.bf16.mxu0 %v1079
      %1928 = vmatmul.mubr.bf16.gmra.mrb[0].mxu0 %v1078
      %v1929 = vpop.f32.mrb[0].mxu0
      %v1930 = vadd.f32 %v1705, %v1929
      %v1931 = vpop.f32.mrb[0].mxu0
      %v1932 = vpop.f32.mrb[0].mxu0
      %v1933 = vadd.f32 %v1708, %v1932
      %v1934 = vpop.f32.mrb[0].mxu0
      %1935 = vmatprep.mubr.bf16.mxu0 %v1085
      %1936 = vmatmul.mubr.bf16.gmra.mrb[0].mxu0 %v1084
      %v1937 = vpop.f32.mrb[0].mxu0
      %v1938 = vadd.f32 %v1713, %v1937
      %v1939 = vpop.f32.mrb[0].mxu0
      %v1940 = vpop.f32.mrb[0].mxu0
      %v1941 = vadd.f32 %v1716, %v1940
      %v1942 = vpop.f32.mrb[0].mxu0
      %1943 = vmatprep.mubr.bf16.mxu0 %v1091
      %1944 = vmatmul.mubr.bf16.gmra.mrb[0].mxu0 %v1090
      %v1945 = vpop.f32.mrb[0].mxu0
      %v1946 = vadd.f32 %v1721, %v1945
      %v1947 = vpop.f32.mrb[0].mxu0
      %v1948 = vpop.f32.mrb[0].mxu0
      %v1949 = vadd.f32 %v1724, %v1948
      %v1950 = vpop.f32.mrb[0].mxu0
      %1951 = vmatprep.mubr.bf16.mxu0 %v1097
      %1952 = vmatmul.mubr.bf16.gmra.mrb[0].mxu0 %v1096
      %v1953 = vpop.f32.mrb[0].mxu0
      %v1954 = vadd.f32 %v1729, %v1953
      %v1955 = vpop.f32.mrb[0].mxu0
      %v1956 = vpop.f32.mrb[0].mxu0
      %v1957 = vadd.f32 %v1732, %v1956
      %v1958 = vpop.f32.mrb[0].mxu0
      %1959 = vmatprep.mubr.bf16.mxu0 %v1103
      %1960 = vmatmul.mubr.bf16.gmra.mrb[0].mxu0 %v1102
      %v1961 = vpop.f32.mrb[0].mxu0
      %v1962 = vadd.f32 %v1737, %v1961
      %v1963 = vpop.f32.mrb[0].mxu0
      %v1964 = vpop.f32.mrb[0].mxu0
      %v1965 = vadd.f32 %v1740, %v1964
      %v1966 = vpop.f32.mrb[0].mxu0
      %1967 = vmatprep.mubr.bf16.mxu0 %v1109
      %1968 = vmatmul.mubr.bf16.gmra.mrb[0].mxu0 %v1108
      %v1969 = vpop.f32.mrb[0].mxu0
      %v1970 = vadd.f32 %v1745, %v1969
      %v1971 = vpop.f32.mrb[0].mxu0
      %v1972 = vpop.f32.mrb[0].mxu0
      %v1973 = vadd.f32 %v1748, %v1972
      %v1974 = vpop.f32.mrb[0].mxu0
      %1975 = vmatprep.mubr.bf16.mxu0 %v1115
      %1976 = vmatmul.mubr.bf16.gmra.mrb[0].mxu0 %v1114
      %v1977 = vpop.f32.mrb[0].mxu0
      %v1978 = vadd.f32 %v1753, %v1977
      %v1979 = vpop.f32.mrb[0].mxu0
      %v1980 = vpop.f32.mrb[0].mxu0
      %v1981 = vadd.f32 %v1756, %v1980
      %v1982 = vpop.f32.mrb[0].mxu0
      %1983 = vmatprep.mubr.bf16.mxu0 %v1121
      %1984 = vmatmul.mubr.bf16.gmra.mrb[0].mxu0 %v1120
      %v1985 = vpop.f32.mrb[0].mxu0
      %v1986 = vadd.f32 %v1761, %v1985
      %v1987 = vpop.f32.mrb[0].mxu0
      %v1988 = vpop.f32.mrb[0].mxu0
      %v1989 = vadd.f32 %v1764, %v1988
      %v1990 = vpop.f32.mrb[0].mxu0
      %1991 = vmatprep.mubr.bf16.mxu0 %v1127
      %1992 = vmatmul.mubr.bf16.gmra.mrb[0].mxu0 %v1126
      %v1993 = vpop.f32.mrb[0].mxu0
      %v1994 = vadd.f32 %v1769, %v1993
      %v1995 = vpop.f32.mrb[0].mxu0
      %v1996 = vpop.f32.mrb[0].mxu0
      %v1997 = vadd.f32 %v1772, %v1996
      %v1998 = vpop.f32.mrb[0].mxu0
      %1999 = vmatprep.mubr.bf16.mxu0 %v1133
      %2000 = vmatmul.mubr.bf16.gmra.mrb[0].mxu0 %v1132
      %v2001 = vpop.f32.mrb[0].mxu0
      %v2002 = vadd.f32 %v1777, %v2001
      %v2003 = vpop.f32.mrb[0].mxu0
      %v2004 = vpop.f32.mrb[0].mxu0
      %v2005 = vadd.f32 %v1780, %v2004
      %v2006 = vpop.f32.mrb[0].mxu0
      %2007 = vmatprep.mubr.bf16.mxu0 %v1139
      %2008 = vmatmul.mubr.bf16.gmra.mrb[0].mxu0 %v1138
      %v2009 = vpop.f32.mrb[0].mxu0
      %v2010 = vadd.f32 %v1785, %v2009
      %v2011 = vpop.f32.mrb[0].mxu0
      %v2012 = vpop.f32.mrb[0].mxu0
      %v2013 = vadd.f32 %v1788, %v2012
      %v2014 = vpop.f32.mrb[0].mxu0
      %2015 = vmatprep.mubr.bf16.mxu0 %v1145
      %2016 = vmatmul.mubr.bf16.gmra.mrb[0].mxu0 %v1144
      %v2017 = vpop.f32.mrb[0].mxu0
      %v2018 = vadd.f32 %v1793, %v2017
      %v2019 = vpop.f32.mrb[0].mxu0
      %v2020 = vpop.f32.mrb[0].mxu0
      %v2021 = vadd.f32 %v1796, %v2020
      %v2022 = vpop.f32.mrb[0].mxu0
      %2023 = vmatprep.mubr.bf16.mxu0 %v1151
      %2024 = vmatmul.mubr.bf16.gmra.mrb[0].mxu0 %v1150
      %v2025 = vpop.f32.mrb[0].mxu0
      %v2026 = vadd.f32 %v1801, %v2025
      %v2027 = vpop.f32.mrb[0].mxu0
      %v2028 = vpop.f32.mrb[0].mxu0
      %v2029 = vadd.f32 %v1804, %v2028
      %v2030 = vpop.f32.mrb[0].mxu0
      %2031 = vmatprep.mubr.bf16.mxu0 %v1157
      %2032 = vmatmul.mubr.bf16.gmra.mrb[0].mxu0 %v1156
      %v2033 = vpop.f32.mrb[0].mxu0
      %v2034 = vadd.f32 %v1809, %v2033
      %v2035 = vpop.f32.mrb[0].mxu0
      %v2036 = vpop.f32.mrb[0].mxu0
      %v2037 = vadd.f32 %v1812, %v2036
      %v2038 = vpop.f32.mrb[0].mxu0
      %2039 = vmatprep.mubr.bf16.mxu0 %v1163
      %2040 = vmatmul.mubr.bf16.gmra.mrb[0].mxu0 %v1162
      %v2041 = vpop.f32.mrb[0].mxu0
      %v2042 = vadd.f32 %v1817, %v2041
      %v2043 = vpop.f32.mrb[0].mxu0
      %v2044 = vpop.f32.mrb[0].mxu0
      %v2045 = vadd.f32 %v1820, %v2044
      %v2046 = vpop.f32.mrb[0].mxu0
      %2047 = vdwg.mxu0
      %2048 = vmatprep.subr.bf16.mxu0 0
      %2049 = vmatpush1.bf16.msra.mxu0 %v1534
      %2050 = vmatprep.subr.bf16.mxu0 0
      %2051 = vmatpush1.bf16.msra.mxu0 %v1535
      %2052 = vmatprep.subr.bf16.mxu0 0
      %2053 = vmatpush1.bf16.msra.mxu0 %v1536
      %2054 = vmatprep.subr.bf16.mxu0 0
      %2055 = vmatpush1.bf16.msra.mxu0 %v1537
      %2056 = vmatprep.subr.bf16.mxu0 0
      %2057 = vmatpush1.bf16.msra.mxu0 %v1538
      %2058 = vmatprep.subr.bf16.mxu0 0
      %2059 = vmatpush1.bf16.msra.mxu0 %v1539
      %2060 = vmatprep.subr.bf16.mxu0 0
      %2061 = vmatpush1.bf16.msra.mxu0 %v1540
      %2062 = vmatprep.subr.bf16.mxu0 0
      %2063 = vmatpush1.bf16.msra.mxu0 %v1541
      %2064 = vmatprep.subr.bf16.mxu0 0
      %2065 = vmatpush1.bf16.msra.mxu0 %v1542
      %2066 = vmatprep.subr.bf16.mxu0 0
      %2067 = vmatpush1.bf16.msra.mxu0 %v1543
      %2068 = vmatprep.subr.bf16.mxu0 0
      %2069 = vmatpush1.bf16.msra.mxu0 %v1544
      %2070 = vmatprep.subr.bf16.mxu0 0
      %2071 = vmatpush1.bf16.msra.mxu0 %v1545
      %2072 = vmatprep.subr.bf16.mxu0 0
      %2073 = vmatpush1.bf16.msra.mxu0 %v1546
      %2074 = vmatprep.subr.bf16.mxu0 0
      %2075 = vmatpush1.bf16.msra.mxu0 %v1547
      %2076 = vmatprep.subr.bf16.mxu0 0
      %2077 = vmatpush1.bf16.msra.mxu0 %v1548
      %2078 = vmatprep.subr.bf16.mxu0 0
      %2079 = vmatpush1.bf16.msra.mxu0 %v1549
      %2080 = vmatprep.mubr.bf16.mxu0 %v1027
      %2081 = vmatmul.mubr.bf16.gmra.mrb[0].mxu0 %v1026
      %v2082 = vpop.f32.mrb[0].mxu0
      %v2083 = vadd.f32 %v1858, %v2082
      %v2084 = vpop.f32.mrb[0].mxu0
      %v2085 = vpop.f32.mrb[0].mxu0
      %v2086 = vadd.f32 %v1861, %v2085
      %v2087 = vpop.f32.mrb[0].mxu0
      %2088 = vmatprep.mubr.bf16.mxu0 %v1033
      %2089 = vmatmul.mubr.bf16.gmra.mrb[0].mxu0 %v1032
      %v2090 = vpop.f32.mrb[0].mxu0
      %v2091 = vadd.f32 %v1866, %v2090
      %v2092 = vpop.f32.mrb[0].mxu0
      %v2093 = vpop.f32.mrb[0].mxu0
      %v2094 = vadd.f32 %v1869, %v2093
      %v2095 = vpop.f32.mrb[0].mxu0
      %2096 = vmatprep.mubr.bf16.mxu0 %v1039
      %2097 = vmatmul.mubr.bf16.gmra.mrb[0].mxu0 %v1038
      %v2098 = vpop.f32.mrb[0].mxu0
      %v2099 = vadd.f32 %v1874, %v2098
      %v2100 = vpop.f32.mrb[0].mxu0
      %v2101 = vpop.f32.mrb[0].mxu0
      %v2102 = vadd.f32 %v1877, %v2101
      %v2103 = vpop.f32.mrb[0].mxu0
      %2104 = vmatprep.mubr.bf16.mxu0 %v1045
      %2105 = vmatmul.mubr.bf16.gmra.mrb[0].mxu0 %v1044
      %v2106 = vpop.f32.mrb[0].mxu0
      %v2107 = vadd.f32 %v1882, %v2106
      %v2108 = vpop.f32.mrb[0].mxu0
      %v2109 = vpop.f32.mrb[0].mxu0
      %v2110 = vadd.f32 %v1885, %v2109
      %v2111 = vpop.f32.mrb[0].mxu0
      %2112 = vmatprep.mubr.bf16.mxu0 %v1051
      %2113 = vmatmul.mubr.bf16.gmra.mrb[0].mxu0 %v1050
      %v2114 = vpop.f32.mrb[0].mxu0
      %v2115 = vadd.f32 %v1890, %v2114
      %v2116 = vpop.f32.mrb[0].mxu0
      %v2117 = vpop.f32.mrb[0].mxu0
      %v2118 = vadd.f32 %v1893, %v2117
      %v2119 = vpop.f32.mrb[0].mxu0
      %2120 = vmatprep.mubr.bf16.mxu0 %v1057
      %2121 = vmatmul.mubr.bf16.gmra.mrb[0].mxu0 %v1056
      %v2122 = vpop.f32.mrb[0].mxu0
      %v2123 = vadd.f32 %v1898, %v2122
      %v2124 = vpop.f32.mrb[0].mxu0
      %v2125 = vpop.f32.mrb[0].mxu0
      %v2126 = vadd.f32 %v1901, %v2125
      %v2127 = vpop.f32.mrb[0].mxu0
      %2128 = vmatprep.mubr.bf16.mxu0 %v1063
      %2129 = vmatmul.mubr.bf16.gmra.mrb[0].mxu0 %v1062
      %v2130 = vpop.f32.mrb[0].mxu0
      %v2131 = vadd.f32 %v1906, %v2130
      %v2132 = vpop.f32.mrb[0].mxu0
      %v2133 = vpop.f32.mrb[0].mxu0
      %v2134 = vadd.f32 %v1909, %v2133
      %v2135 = vpop.f32.mrb[0].mxu0
      %2136 = vmatprep.mubr.bf16.mxu0 %v1069
      %2137 = vmatmul.mubr.bf16.gmra.mrb[0].mxu0 %v1068
      %v2138 = vpop.f32.mrb[0].mxu0
      %v2139 = vadd.f32 %v1914, %v2138
      %v2140 = vpop.f32.mrb[0].mxu0
      %v2141 = vpop.f32.mrb[0].mxu0
      %v2142 = vadd.f32 %v1917, %v2141
      %v2143 = vpop.f32.mrb[0].mxu0
      %2144 = vmatprep.mubr.bf16.mxu0 %v1075
      %2145 = vmatmul.mubr.bf16.gmra.mrb[0].mxu0 %v1074
      %v2146 = vpop.f32.mrb[0].mxu0
      %v2147 = vadd.f32 %v1922, %v2146
      %v2148 = vpop.f32.mrb[0].mxu0
      %v2149 = vpop.f32.mrb[0].mxu0
      %v2150 = vadd.f32 %v1925, %v2149
      %v2151 = vpop.f32.mrb[0].mxu0
      %2152 = vmatprep.mubr.bf16.mxu0 %v1081
      %2153 = vmatmul.mubr.bf16.gmra.mrb[0].mxu0 %v1080
      %v2154 = vpop.f32.mrb[0].mxu0
      %v2155 = vadd.f32 %v1930, %v2154
      %v2156 = vpop.f32.mrb[0].mxu0
      %v2157 = vpop.f32.mrb[0].mxu0
      %v2158 = vadd.f32 %v1933, %v2157
      %v2159 = vpop.f32.mrb[0].mxu0
      %2160 = vmatprep.mubr.bf16.mxu0 %v1087
      %2161 = vmatmul.mubr.bf16.gmra.mrb[0].mxu0 %v1086
      %v2162 = vpop.f32.mrb[0].mxu0
      %v2163 = vadd.f32 %v1938, %v2162
      %v2164 = vpop.f32.mrb[0].mxu0
      %v2165 = vpop.f32.mrb[0].mxu0
      %v2166 = vadd.f32 %v1941, %v2165
      %v2167 = vpop.f32.mrb[0].mxu0
      %2168 = vmatprep.mubr.bf16.mxu0 %v1093
      %2169 = vmatmul.mubr.bf16.gmra.mrb[0].mxu0 %v1092
      %v2170 = vpop.f32.mrb[0].mxu0
      %v2171 = vadd.f32 %v1946, %v2170
      %v2172 = vpop.f32.mrb[0].mxu0
      %v2173 = vpop.f32.mrb[0].mxu0
      %v2174 = vadd.f32 %v1949, %v2173
      %v2175 = vpop.f32.mrb[0].mxu0
      %2176 = vmatprep.mubr.bf16.mxu0 %v1099
      %2177 = vmatmul.mubr.bf16.gmra.mrb[0].mxu0 %v1098
      %v2178 = vpop.f32.mrb[0].mxu0
      %v2179 = vadd.f32 %v1954, %v2178
      %v2180 = vpop.f32.mrb[0].mxu0
      %v2181 = vpop.f32.mrb[0].mxu0
      %v2182 = vadd.f32 %v1957, %v2181
      %v2183 = vpop.f32.mrb[0].mxu0
      %2184 = vmatprep.mubr.bf16.mxu0 %v1105
      %2185 = vmatmul.mubr.bf16.gmra.mrb[0].mxu0 %v1104
      %v2186 = vpop.f32.mrb[0].mxu0
      %v2187 = vadd.f32 %v1962, %v2186
      %v2188 = vpop.f32.mrb[0].mxu0
      %v2189 = vpop.f32.mrb[0].mxu0
      %v2190 = vadd.f32 %v1965, %v2189
      %v2191 = vpop.f32.mrb[0].mxu0
      %2192 = vmatprep.mubr.bf16.mxu0 %v1111
      %2193 = vmatmul.mubr.bf16.gmra.mrb[0].mxu0 %v1110
      %v2194 = vpop.f32.mrb[0].mxu0
      %v2195 = vadd.f32 %v1970, %v2194
      %v2196 = vpop.f32.mrb[0].mxu0
      %v2197 = vpop.f32.mrb[0].mxu0
      %v2198 = vadd.f32 %v1973, %v2197
      %v2199 = vpop.f32.mrb[0].mxu0
      %2200 = vmatprep.mubr.bf16.mxu0 %v1117
      %2201 = vmatmul.mubr.bf16.gmra.mrb[0].mxu0 %v1116
      %v2202 = vpop.f32.mrb[0].mxu0
      %v2203 = vadd.f32 %v1978, %v2202
      %v2204 = vpop.f32.mrb[0].mxu0
      %v2205 = vpop.f32.mrb[0].mxu0
      %v2206 = vadd.f32 %v1981, %v2205
      %v2207 = vpop.f32.mrb[0].mxu0
      %2208 = vmatprep.mubr.bf16.mxu0 %v1123
      %2209 = vmatmul.mubr.bf16.gmra.mrb[0].mxu0 %v1122
      %v2210 = vpop.f32.mrb[0].mxu0
      %v2211 = vadd.f32 %v1986, %v2210
      %v2212 = vpop.f32.mrb[0].mxu0
      %v2213 = vpop.f32.mrb[0].mxu0
      %v2214 = vadd.f32 %v1989, %v2213
      %v2215 = vpop.f32.mrb[0].mxu0
      %2216 = vmatprep.mubr.bf16.mxu0 %v1129
      %2217 = vmatmul.mubr.bf16.gmra.mrb[0].mxu0 %v1128
      %v2218 = vpop.f32.mrb[0].mxu0
      %v2219 = vadd.f32 %v1994, %v2218
      %v2220 = vpop.f32.mrb[0].mxu0
      %v2221 = vpop.f32.mrb[0].mxu0
      %v2222 = vadd.f32 %v1997, %v2221
      %v2223 = vpop.f32.mrb[0].mxu0
      %2224 = vmatprep.mubr.bf16.mxu0 %v1135
      %2225 = vmatmul.mubr.bf16.gmra.mrb[0].mxu0 %v1134
      %v2226 = vpop.f32.mrb[0].mxu0
      %v2227 = vadd.f32 %v2002, %v2226
      %v2228 = vpop.f32.mrb[0].mxu0
      %v2229 = vpop.f32.mrb[0].mxu0
      %v2230 = vadd.f32 %v2005, %v2229
      %v2231 = vpop.f32.mrb[0].mxu0
      %2232 = vmatprep.mubr.bf16.mxu0 %v1141
      %2233 = vmatmul.mubr.bf16.gmra.mrb[0].mxu0 %v1140
      %v2234 = vpop.f32.mrb[0].mxu0
      %v2235 = vadd.f32 %v2010, %v2234
      %v2236 = vpop.f32.mrb[0].mxu0
      %v2237 = vpop.f32.mrb[0].mxu0
      %v2238 = vadd.f32 %v2013, %v2237
      %v2239 = vpop.f32.mrb[0].mxu0
      %2240 = vmatprep.mubr.bf16.mxu0 %v1147
      %2241 = vmatmul.mubr.bf16.gmra.mrb[0].mxu0 %v1146
      %v2242 = vpop.f32.mrb[0].mxu0
      %v2243 = vadd.f32 %v2018, %v2242
      %v2244 = vpop.f32.mrb[0].mxu0
      %v2245 = vpop.f32.mrb[0].mxu0
      %v2246 = vadd.f32 %v2021, %v2245
      %v2247 = vpop.f32.mrb[0].mxu0
      %2248 = vmatprep.mubr.bf16.mxu0 %v1153
      %2249 = vmatmul.mubr.bf16.gmra.mrb[0].mxu0 %v1152
      %v2250 = vpop.f32.mrb[0].mxu0
      %v2251 = vadd.f32 %v2026, %v2250
      %v2252 = vpop.f32.mrb[0].mxu0
      %v2253 = vpop.f32.mrb[0].mxu0
      %v2254 = vadd.f32 %v2029, %v2253
      %v2255 = vpop.f32.mrb[0].mxu0
      %2256 = vmatprep.mubr.bf16.mxu0 %v1159
      %2257 = vmatmul.mubr.bf16.gmra.mrb[0].mxu0 %v1158
      %v2258 = vpop.f32.mrb[0].mxu0
      %v2259 = vadd.f32 %v2034, %v2258
      %v2260 = vpop.f32.mrb[0].mxu0
      %v2261 = vpop.f32.mrb[0].mxu0
      %v2262 = vadd.f32 %v2037, %v2261
      %v2263 = vpop.f32.mrb[0].mxu0
      %2264 = vmatprep.mubr.bf16.mxu0 %v1165
      %2265 = vmatmul.mubr.bf16.gmra.mrb[0].mxu0 %v1164
      %v2266 = vpop.f32.mrb[0].mxu0
      %v2267 = vadd.f32 %v2042, %v2266
      %v2268 = vpop.f32.mrb[0].mxu0
      %v2269 = vpop.f32.mrb[0].mxu0
      %v2270 = vadd.f32 %v2045, %v2269
      %v2271 = vpop.f32.mrb[0].mxu0
      %2272 = vdwg.mxu0
      %v2273 = vpack.c.bf16 %v2086, %v2083
      %v2274 = vpack.c.bf16 %v2094, %v2091
      %v2275 = vpack.c.bf16 %v2102, %v2099
      %v2276 = vpack.c.bf16 %v2110, %v2107
      %v2277 = vpack.c.bf16 %v2118, %v2115
      %v2278 = vpack.c.bf16 %v2126, %v2123
      %v2279 = vpack.c.bf16 %v2134, %v2131
      %v2280 = vpack.c.bf16 %v2142, %v2139
      %v2281 = vpack.c.bf16 %v2150, %v2147
      %v2282 = vpack.c.bf16 %v2158, %v2155
      %v2283 = vpack.c.bf16 %v2166, %v2163
      %v2284 = vpack.c.bf16 %v2174, %v2171
      %v2285 = vpack.c.bf16 %v2182, %v2179
      %v2286 = vpack.c.bf16 %v2190, %v2187
      %v2287 = vpack.c.bf16 %v2198, %v2195
      %v2288 = vpack.c.bf16 %v2206, %v2203
      %v2289 = vpack.c.bf16 %v2214, %v2211
      %v2290 = vpack.c.bf16 %v2222, %v2219
      %v2291 = vpack.c.bf16 %v2230, %v2227
      %v2292 = vpack.c.bf16 %v2238, %v2235
      %v2293 = vpack.c.bf16 %v2246, %v2243
      %v2294 = vpack.c.bf16 %v2254, %v2251
      %v2295 = vpack.c.bf16 %v2262, %v2259
      %v2296 = vpack.c.bf16 %v2270, %v2267
      %v2297 = vld [vmem:[%s3] sm:$0xf]
      %v2298 = vld [vmem:[%s3 + $0x4] sm:$0xf]
      %v2299 = vld [vmem:[%s3 + $0x8] sm:$0xf]
      %v2300 = vld [vmem:[%s3 + $0xc] sm:$0xf]
      %v2301 = vld [vmem:[%s3 + $0x10] sm:$0xf]
      %v2302 = vld [vmem:[%s3 + $0x14] sm:$0xf]
      %v2303 = vld [vmem:[%s3 + $0x18] sm:$0xf]
      %v2304 = vld [vmem:[%s3 + $0x1c] sm:$0xf]
      %v2305 = vld [vmem:[%s3 + $0x20] sm:$0xf]
      %v2306 = vld [vmem:[%s3 + $0x24] sm:$0xf]
      %v2307 = vld [vmem:[%s3 + $0x28] sm:$0xf]
      %v2308 = vld [vmem:[%s3 + $0x2c] sm:$0xf]
      %v2309 = vld [vmem:[%s3 + $0x30] sm:$0xf]
      %v2310 = vld [vmem:[%s3 + $0x34] sm:$0xf]
      %v2311 = vld [vmem:[%s3 + $0x38] sm:$0xf]
      %v2312 = vld [vmem:[%s3 + $0x3c] sm:$0xf]
      %v2313 = vld [vmem:[%s4] sm:$0x1]
      %v2315 = vlaneseq
      %v2316 = vshrl.u32 %v2315, 7
      %v2317 = vsub.s32 0, %v2316
      %v2318 = vrot.slane %v2313, %v2317
      %v2336 = vunpack.c.l.b16 %v2297
      %v2337 = vunpack.c.l.b16 %v2298
      %v2338 = vunpack.c.l.b16 %v2299
      %v2339 = vunpack.c.l.b16 %v2300
      %v2340 = vunpack.c.l.b16 %v2301
      %v2341 = vunpack.c.l.b16 %v2302
      %v2342 = vunpack.c.l.b16 %v2303
      %v2343 = vunpack.c.l.b16 %v2304
      %v2344 = vunpack.c.l.b16 %v2305
      %v2345 = vunpack.c.l.b16 %v2306
      %v2346 = vunpack.c.l.b16 %v2307
      %v2347 = vunpack.c.l.b16 %v2308
      %v2348 = vunpack.c.l.b16 %v2309
      %v2349 = vunpack.c.l.b16 %v2310
      %v2350 = vunpack.c.l.b16 %v2311
      %v2351 = vunpack.c.l.b16 %v2312
      %v2352 = vpack.c.b16 %v2337, %v2336
      %v2353 = vpack.c.b16 %v2339, %v2338
      %v2354 = vpack.c.b16 %v2341, %v2340
      %v2355 = vpack.c.b16 %v2343, %v2342
      %v2356 = vpack.c.b16 %v2345, %v2344
      %v2357 = vpack.c.b16 %v2347, %v2346
      %v2358 = vpack.c.b16 %v2349, %v2348
      %v2359 = vpack.c.b16 %v2351, %v2350
      %2368 = vmatprep.subr.bf16.mxu0 0
      %2369 = vmatpush1.bf16.msra.mxu0 %v2352
      %2370 = vmatprep.subr.bf16.mxu0 0
      %2371 = vmatpush1.bf16.msra.mxu0 %v2353
      %2372 = vmatprep.subr.bf16.mxu0 0
      %2373 = vmatpush1.bf16.msra.mxu0 %v2354
      %2374 = vmatprep.subr.bf16.mxu0 0
      %2375 = vmatpush1.bf16.msra.mxu0 %v2355
      %2376 = vmatprep.subr.bf16.mxu0 0
      %2377 = vmatpush1.bf16.msra.mxu0 %v2356
      %2378 = vmatprep.subr.bf16.mxu0 0
      %2379 = vmatpush1.bf16.msra.mxu0 %v2357
      %2380 = vmatprep.subr.bf16.mxu0 0
      %2381 = vmatpush1.bf16.msra.mxu0 %v2358
      %2382 = vmatprep.subr.bf16.mxu0 0
      %2383 = vmatpush1.bf16.msra.mxu0 %v2359
      %2384 = vmatprep.subr.bf16.mxu0 0
      %2385 = vmatpush1.bf16.msra.mxu0 0
      %2386 = vmatprep.subr.bf16.mxu0 0
      %2387 = vmatpush1.bf16.msra.mxu0 0
      %2388 = vmatprep.subr.bf16.mxu0 0
      %2389 = vmatpush1.bf16.msra.mxu0 0
      %2390 = vmatprep.subr.bf16.mxu0 0
      %2391 = vmatpush1.bf16.msra.mxu0 0
      %2392 = vmatprep.subr.bf16.mxu0 0
      %2393 = vmatpush1.bf16.msra.mxu0 0
      %2394 = vmatprep.subr.bf16.mxu0 0
      %2395 = vmatpush1.bf16.msra.mxu0 0
      %2396 = vmatprep.subr.bf16.mxu0 0
      %2397 = vmatpush1.bf16.msra.mxu0 0
      %2398 = vmatprep.subr.bf16.mxu0 0
      %2399 = vmatpush1.bf16.msra.mxu0 0
      %2400 = vmatprep.mubr.bf16.mxu0 0
      %2401 = vmatmul.mubr.bf16.gmra.mrb[0].mxu0 %v2273
      %v2402 = vpop.f32.mrb[0].mxu0
      %v2403 = vadd.f32 %v2318, %v2402
      %v2404 = vpop.f32.mrb[0].mxu0
      %v2405 = vpop.f32.mrb[0].mxu0
      %v2406 = vadd.f32 %v2318, %v2405
      %v2407 = vpop.f32.mrb[0].mxu0
      %2408 = vmatprep.mubr.bf16.mxu0 0
      %2409 = vmatmul.mubr.bf16.gmra.mrb[0].mxu0 %v2274
      %v2410 = vpop.f32.mrb[0].mxu0
      %v2411 = vadd.f32 %v2318, %v2410
      %v2412 = vpop.f32.mrb[0].mxu0
      %v2413 = vpop.f32.mrb[0].mxu0
      %v2414 = vadd.f32 %v2318, %v2413
      %v2415 = vpop.f32.mrb[0].mxu0
      %2416 = vmatprep.mubr.bf16.mxu0 0
      %2417 = vmatmul.mubr.bf16.gmra.mrb[0].mxu0 %v2275
      %v2418 = vpop.f32.mrb[0].mxu0
      %v2419 = vadd.f32 %v2318, %v2418
      %v2420 = vpop.f32.mrb[0].mxu0
      %v2421 = vpop.f32.mrb[0].mxu0
      %v2422 = vadd.f32 %v2318, %v2421
      %v2423 = vpop.f32.mrb[0].mxu0
      %2424 = vmatprep.mubr.bf16.mxu0 0
      %2425 = vmatmul.mubr.bf16.gmra.mrb[0].mxu0 %v2276
      %v2426 = vpop.f32.mrb[0].mxu0
      %v2427 = vadd.f32 %v2318, %v2426
      %v2428 = vpop.f32.mrb[0].mxu0
      %v2429 = vpop.f32.mrb[0].mxu0
      %v2430 = vadd.f32 %v2318, %v2429
      %v2431 = vpop.f32.mrb[0].mxu0
      %2432 = vmatprep.mubr.bf16.mxu0 0
      %2433 = vmatmul.mubr.bf16.gmra.mrb[0].mxu0 %v2277
      %v2434 = vpop.f32.mrb[0].mxu0
      %v2435 = vadd.f32 %v2318, %v2434
      %v2436 = vpop.f32.mrb[0].mxu0
      %v2437 = vpop.f32.mrb[0].mxu0
      %v2438 = vadd.f32 %v2318, %v2437
      %v2439 = vpop.f32.mrb[0].mxu0
      %2440 = vmatprep.mubr.bf16.mxu0 0
      %2441 = vmatmul.mubr.bf16.gmra.mrb[0].mxu0 %v2278
      %v2442 = vpop.f32.mrb[0].mxu0
      %v2443 = vadd.f32 %v2318, %v2442
      %v2444 = vpop.f32.mrb[0].mxu0
      %v2445 = vpop.f32.mrb[0].mxu0
      %v2446 = vadd.f32 %v2318, %v2445
      %v2447 = vpop.f32.mrb[0].mxu0
      %2448 = vmatprep.mubr.bf16.mxu0 0
      %2449 = vmatmul.mubr.bf16.gmra.mrb[0].mxu0 %v2279
      %v2450 = vpop.f32.mrb[0].mxu0
      %v2451 = vadd.f32 %v2318, %v2450
      %v2452 = vpop.f32.mrb[0].mxu0
      %v2453 = vpop.f32.mrb[0].mxu0
      %v2454 = vadd.f32 %v2318, %v2453
      %v2455 = vpop.f32.mrb[0].mxu0
      %2456 = vmatprep.mubr.bf16.mxu0 0
      %2457 = vmatmul.mubr.bf16.gmra.mrb[0].mxu0 %v2280
      %v2458 = vpop.f32.mrb[0].mxu0
      %v2459 = vadd.f32 %v2318, %v2458
      %v2460 = vpop.f32.mrb[0].mxu0
      %v2461 = vpop.f32.mrb[0].mxu0
      %v2462 = vadd.f32 %v2318, %v2461
      %v2463 = vpop.f32.mrb[0].mxu0
      %2464 = vmatprep.mubr.bf16.mxu0 0
      %2465 = vmatmul.mubr.bf16.gmra.mrb[0].mxu0 %v2281
      %v2466 = vpop.f32.mrb[0].mxu0
      %v2467 = vadd.f32 %v2318, %v2466
      %v2468 = vpop.f32.mrb[0].mxu0
      %v2469 = vpop.f32.mrb[0].mxu0
      %v2470 = vadd.f32 %v2318, %v2469
      %v2471 = vpop.f32.mrb[0].mxu0
      %2472 = vmatprep.mubr.bf16.mxu0 0
      %2473 = vmatmul.mubr.bf16.gmra.mrb[0].mxu0 %v2282
      %v2474 = vpop.f32.mrb[0].mxu0
      %v2475 = vadd.f32 %v2318, %v2474
      %v2476 = vpop.f32.mrb[0].mxu0
      %v2477 = vpop.f32.mrb[0].mxu0
      %v2478 = vadd.f32 %v2318, %v2477
      %v2479 = vpop.f32.mrb[0].mxu0
      %2480 = vmatprep.mubr.bf16.mxu0 0
      %2481 = vmatmul.mubr.bf16.gmra.mrb[0].mxu0 %v2283
      %v2482 = vpop.f32.mrb[0].mxu0
      %v2483 = vadd.f32 %v2318, %v2482
      %v2484 = vpop.f32.mrb[0].mxu0
      %v2485 = vpop.f32.mrb[0].mxu0
      %v2486 = vadd.f32 %v2318, %v2485
      %v2487 = vpop.f32.mrb[0].mxu0
      %2488 = vmatprep.mubr.bf16.mxu0 0
      %2489 = vmatmul.mubr.bf16.gmra.mrb[0].mxu0 %v2284
      %v2490 = vpop.f32.mrb[0].mxu0
      %v2491 = vadd.f32 %v2318, %v2490
      %v2492 = vpop.f32.mrb[0].mxu0
      %v2493 = vpop.f32.mrb[0].mxu0
      %v2494 = vadd.f32 %v2318, %v2493
      %v2495 = vpop.f32.mrb[0].mxu0
      %2496 = vmatprep.mubr.bf16.mxu0 0
      %2497 = vmatmul.mubr.bf16.gmra.mrb[0].mxu0 %v2285
      %v2498 = vpop.f32.mrb[0].mxu0
      %v2499 = vadd.f32 %v2318, %v2498
      %v2500 = vpop.f32.mrb[0].mxu0
      %v2501 = vpop.f32.mrb[0].mxu0
      %v2502 = vadd.f32 %v2318, %v2501
      %v2503 = vpop.f32.mrb[0].mxu0
      %2504 = vmatprep.mubr.bf16.mxu0 0
      %2505 = vmatmul.mubr.bf16.gmra.mrb[0].mxu0 %v2286
      %v2506 = vpop.f32.mrb[0].mxu0
      %v2507 = vadd.f32 %v2318, %v2506
      %v2508 = vpop.f32.mrb[0].mxu0
      %v2509 = vpop.f32.mrb[0].mxu0
      %v2510 = vadd.f32 %v2318, %v2509
      %v2511 = vpop.f32.mrb[0].mxu0
      %2512 = vmatprep.mubr.bf16.mxu0 0
      %2513 = vmatmul.mubr.bf16.gmra.mrb[0].mxu0 %v2287
      %v2514 = vpop.f32.mrb[0].mxu0
      %v2515 = vadd.f32 %v2318, %v2514
      %v2516 = vpop.f32.mrb[0].mxu0
      %v2517 = vpop.f32.mrb[0].mxu0
      %v2518 = vadd.f32 %v2318, %v2517
      %v2519 = vpop.f32.mrb[0].mxu0
      %2520 = vmatprep.mubr.bf16.mxu0 0
      %2521 = vmatmul.mubr.bf16.gmra.mrb[0].mxu0 %v2288
      %v2522 = vpop.f32.mrb[0].mxu0
      %v2523 = vadd.f32 %v2318, %v2522
      %v2524 = vpop.f32.mrb[0].mxu0
      %v2525 = vpop.f32.mrb[0].mxu0
      %v2526 = vadd.f32 %v2318, %v2525
      %v2527 = vpop.f32.mrb[0].mxu0
      %2528 = vmatprep.mubr.bf16.mxu0 0
      %2529 = vmatmul.mubr.bf16.gmra.mrb[0].mxu0 %v2289
      %v2530 = vpop.f32.mrb[0].mxu0
      %v2531 = vadd.f32 %v2318, %v2530
      %v2532 = vpop.f32.mrb[0].mxu0
      %v2533 = vpop.f32.mrb[0].mxu0
      %v2534 = vadd.f32 %v2318, %v2533
      %v2535 = vpop.f32.mrb[0].mxu0
      %2536 = vmatprep.mubr.bf16.mxu0 0
      %2537 = vmatmul.mubr.bf16.gmra.mrb[0].mxu0 %v2290
      %v2538 = vpop.f32.mrb[0].mxu0
      %v2539 = vadd.f32 %v2318, %v2538
      %v2540 = vpop.f32.mrb[0].mxu0
      %v2541 = vpop.f32.mrb[0].mxu0
      %v2542 = vadd.f32 %v2318, %v2541
      %v2543 = vpop.f32.mrb[0].mxu0
      %2544 = vmatprep.mubr.bf16.mxu0 0
      %2545 = vmatmul.mubr.bf16.gmra.mrb[0].mxu0 %v2291
      %v2546 = vpop.f32.mrb[0].mxu0
      %v2547 = vadd.f32 %v2318, %v2546
      %v2548 = vpop.f32.mrb[0].mxu0
      %v2549 = vpop.f32.mrb[0].mxu0
      %v2550 = vadd.f32 %v2318, %v2549
      %v2551 = vpop.f32.mrb[0].mxu0
      %2552 = vmatprep.mubr.bf16.mxu0 0
      %2553 = vmatmul.mubr.bf16.gmra.mrb[0].mxu0 %v2292
      %v2554 = vpop.f32.mrb[0].mxu0
      %v2555 = vadd.f32 %v2318, %v2554
      %v2556 = vpop.f32.mrb[0].mxu0
      %v2557 = vpop.f32.mrb[0].mxu0
      %v2558 = vadd.f32 %v2318, %v2557
      %v2559 = vpop.f32.mrb[0].mxu0
      %2560 = vmatprep.mubr.bf16.mxu0 0
      %2561 = vmatmul.mubr.bf16.gmra.mrb[0].mxu0 %v2293
      %v2562 = vpop.f32.mrb[0].mxu0
      %v2563 = vadd.f32 %v2318, %v2562
      %v2564 = vpop.f32.mrb[0].mxu0
      %v2565 = vpop.f32.mrb[0].mxu0
      %v2566 = vadd.f32 %v2318, %v2565
      %v2567 = vpop.f32.mrb[0].mxu0
      %2568 = vmatprep.mubr.bf16.mxu0 0
      %2569 = vmatmul.mubr.bf16.gmra.mrb[0].mxu0 %v2294
      %v2570 = vpop.f32.mrb[0].mxu0
      %v2571 = vadd.f32 %v2318, %v2570
      %v2572 = vpop.f32.mrb[0].mxu0
      %v2573 = vpop.f32.mrb[0].mxu0
      %v2574 = vadd.f32 %v2318, %v2573
      %v2575 = vpop.f32.mrb[0].mxu0
      %2576 = vmatprep.mubr.bf16.mxu0 0
      %2577 = vmatmul.mubr.bf16.gmra.mrb[0].mxu0 %v2295
      %v2578 = vpop.f32.mrb[0].mxu0
      %v2579 = vadd.f32 %v2318, %v2578
      %v2580 = vpop.f32.mrb[0].mxu0
      %v2581 = vpop.f32.mrb[0].mxu0
      %v2582 = vadd.f32 %v2318, %v2581
      %v2583 = vpop.f32.mrb[0].mxu0
      %2584 = vmatprep.mubr.bf16.mxu0 0
      %2585 = vmatmul.mubr.bf16.gmra.mrb[0].mxu0 %v2296
      %v2586 = vpop.f32.mrb[0].mxu0
      %v2587 = vadd.f32 %v2318, %v2586
      %v2588 = vpop.f32.mrb[0].mxu0
      %v2589 = vpop.f32.mrb[0].mxu0
      %v2590 = vadd.f32 %v2318, %v2589
      %v2591 = vpop.f32.mrb[0].mxu0
      %2592 = vdwg.mxu0
      %v2593 = vmax.f32 %v2403, 0.0
      %v2594 = vmax.f32 %v2406, 0.0
      %v2595 = vmax.f32 %v2411, 0.0
      %v2596 = vmax.f32 %v2414, 0.0
      %v2597 = vmax.f32 %v2419, 0.0
      %v2598 = vmax.f32 %v2422, 0.0
      %v2599 = vmax.f32 %v2427, 0.0
      %v2600 = vmax.f32 %v2430, 0.0
      %v2601 = vmax.f32 %v2435, 0.0
      %v2602 = vmax.f32 %v2438, 0.0
      %v2603 = vmax.f32 %v2443, 0.0
      %v2604 = vmax.f32 %v2446, 0.0
      %v2605 = vmax.f32 %v2451, 0.0
      %v2606 = vmax.f32 %v2454, 0.0
      %v2607 = vmax.f32 %v2459, 0.0
      %v2608 = vmax.f32 %v2462, 0.0
      %v2609 = vmax.f32 %v2467, 0.0
      %v2610 = vmax.f32 %v2470, 0.0
      %v2611 = vmax.f32 %v2475, 0.0
      %v2612 = vmax.f32 %v2478, 0.0
      %v2613 = vmax.f32 %v2483, 0.0
      %v2614 = vmax.f32 %v2486, 0.0
      %v2615 = vmax.f32 %v2491, 0.0
      %v2616 = vmax.f32 %v2494, 0.0
      %v2617 = vmax.f32 %v2499, 0.0
      %v2618 = vmax.f32 %v2502, 0.0
      %v2619 = vmax.f32 %v2507, 0.0
      %v2620 = vmax.f32 %v2510, 0.0
      %v2621 = vmax.f32 %v2515, 0.0
      %v2622 = vmax.f32 %v2518, 0.0
      %v2623 = vmax.f32 %v2523, 0.0
      %v2624 = vmax.f32 %v2526, 0.0
      %v2625 = vmax.f32 %v2531, 0.0
      %v2626 = vmax.f32 %v2534, 0.0
      %v2627 = vmax.f32 %v2539, 0.0
      %v2628 = vmax.f32 %v2542, 0.0
      %v2629 = vmax.f32 %v2547, 0.0
      %v2630 = vmax.f32 %v2550, 0.0
      %v2631 = vmax.f32 %v2555, 0.0
      %v2632 = vmax.f32 %v2558, 0.0
      %v2633 = vmax.f32 %v2563, 0.0
      %v2634 = vmax.f32 %v2566, 0.0
      %v2635 = vmax.f32 %v2571, 0.0
      %v2636 = vmax.f32 %v2574, 0.0
      %v2637 = vmax.f32 %v2579, 0.0
      %v2638 = vmax.f32 %v2582, 0.0
      %v2639 = vmax.f32 %v2587, 0.0
      %v2640 = vmax.f32 %v2590, 0.0
      %2641 = vst [vmem:[%s251] sm:$0xff] %v2593
      %2642 = vst [vmem:[%s251 + $0x8] sm:$0xff] %v2594
      %2643 = vst [vmem:[%s251 + $0x10] sm:$0xff] %v2595
      %2644 = vst [vmem:[%s251 + $0x18] sm:$0xff] %v2596
      %2645 = vst [vmem:[%s251 + $0x20] sm:$0xff] %v2597
      %2646 = vst [vmem:[%s251 + $0x28] sm:$0xff] %v2598
      %2647 = vst [vmem:[%s251 + $0x30] sm:$0xff] %v2599
      %2648 = vst [vmem:[%s251 + $0x38] sm:$0xff] %v2600
      %2649 = vst [vmem:[%s251 + $0x40] sm:$0xff] %v2601
      %2650 = vst [vmem:[%s251 + $0x48] sm:$0xff] %v2602
      %2651 = vst [vmem:[%s251 + $0x50] sm:$0xff] %v2603
      %2652 = vst [vmem:[%s251 + $0x58] sm:$0xff] %v2604
      %2653 = vst [vmem:[%s251 + $0x60] sm:$0xff] %v2605
      %2654 = vst [vmem:[%s251 + $0x68] sm:$0xff] %v2606
      %2655 = vst [vmem:[%s251 + $0x70] sm:$0xff] %v2607
      %2656 = vst [vmem:[%s251 + $0x78] sm:$0xff] %v2608
      %2657 = vst [vmem:[%s251 + $0x80] sm:$0xff] %v2609
      %2658 = vst [vmem:[%s251 + $0x88] sm:$0xff] %v2610
      %2659 = vst [vmem:[%s251 + $0x90] sm:$0xff] %v2611
      %2660 = vst [vmem:[%s251 + $0x98] sm:$0xff] %v2612
      %2661 = vst [vmem:[%s251 + $0xa0] sm:$0xff] %v2613
      %2662 = vst [vmem:[%s251 + $0xa8] sm:$0xff] %v2614
      %2663 = vst [vmem:[%s251 + $0xb0] sm:$0xff] %v2615
      %2664 = vst [vmem:[%s251 + $0xb8] sm:$0xff] %v2616
      %2665 = vst [vmem:[%s251 + $0xc0] sm:$0xff] %v2617
      %2666 = vst [vmem:[%s251 + $0xc8] sm:$0xff] %v2618
      %2667 = vst [vmem:[%s251 + $0xd0] sm:$0xff] %v2619
      %2668 = vst [vmem:[%s251 + $0xd8] sm:$0xff] %v2620
      %2669 = vst [vmem:[%s251 + $0xe0] sm:$0xff] %v2621
      %2670 = vst [vmem:[%s251 + $0xe8] sm:$0xff] %v2622
      %2671 = vst [vmem:[%s251 + $0xf0] sm:$0xff] %v2623
      %2672 = vst [vmem:[%s251 + $0xf8] sm:$0xff] %v2624
      %2673 = vst [vmem:[%s251 + $0x100] sm:$0xff] %v2625
      %2674 = vst [vmem:[%s251 + $0x108] sm:$0xff] %v2626
      %2675 = vst [vmem:[%s251 + $0x110] sm:$0xff] %v2627
      %2676 = vst [vmem:[%s251 + $0x118] sm:$0xff] %v2628
      %2677 = vst [vmem:[%s251 + $0x120] sm:$0xff] %v2629
      %2678 = vst [vmem:[%s251 + $0x128] sm:$0xff] %v2630
      %2679 = vst [vmem:[%s251 + $0x130] sm:$0xff] %v2631
      %2680 = vst [vmem:[%s251 + $0x138] sm:$0xff] %v2632
      %2681 = vst [vmem:[%s251 + $0x140] sm:$0xff] %v2633
      %2682 = vst [vmem:[%s251 + $0x148] sm:$0xff] %v2634
      %2683 = vst [vmem:[%s251 + $0x150] sm:$0xff] %v2635
      %2684 = vst [vmem:[%s251 + $0x158] sm:$0xff] %v2636
      %2685 = vst [vmem:[%s251 + $0x160] sm:$0xff] %v2637
      %2686 = vst [vmem:[%s251 + $0x168] sm:$0xff] %v2638
      %2687 = vst [vmem:[%s251 + $0x170] sm:$0xff] %v2639
      %2688 = vst [vmem:[%s251 + $0x178] sm:$0xff] %v2640
      %s2689 = smul.u32 48, %s16
      %p2690 = scmp.lt.s32.totalorder %s2689, 95
      %s2691 = scalar_select %p2690, %s2689, 95
      %s2692 = smul.addr %s2691, 8
      %s2693 = scalar_lea.vmem %s5, %s2692
      // Predicated region
      $region41: #{gin_conv.1} parent=39 // pred_check
        %p2694 = pneg %p149
      $region42: #{gin_conv.1} parent=39 // pred_check_branch
        %2696 = sbr.rel (%p2694) target = $region44
      $region43: #{gin_conv.1} parent=39 // pred_region
        %s2697 = smul.u32 48, %s16
      $region44: #{gin_conv.1} parent=39 // pred_fallthru
        _
    $region40: #{gin_conv.1} parent=5 // pred_fallthru
      _
    %p2698 = scmp.le.s32.totalorder 2, %s11
    // Predicated region
    $region45: #{gin_conv.1} parent=5 // pred_check
      %p2699 = pneg %p2698
    $region46: #{gin_conv.1} parent=5 // pred_check_branch
      %2701 = sbr.rel (%p2699) target = $region48
    $region47: #{gin_conv.1} parent=5 // pred_region
      %s2702 = ssub.s32 %s11, 2
      // Predicated region
      $region49: #{gin_conv.1} parent=47 // pred_check
        %p2703 = pneg %p155
      $region50: #{gin_conv.1} parent=47 // pred_check_branch
        %2705 = sbr.rel (%p2703) target = $region52
      $region51: #{gin_conv.1} parent=47 // pred_region
        %s2706 = smul.u32 48, %s17
        %p2707 = scmp.lt.s32.totalorder %s2706, 95
        %s2708 = scalar_select %p2707, %s2706, 95
        %s2709 = smul.addr %s2708, 8
        %s2710 = scalar_lea.vmem %s5, %s2709
      $region52: #{gin_conv.1} parent=47 // pred_fallthru
        _
    $region48: #{gin_conv.1} parent=5 // pred_fallthru
      _
  $region6: #{gin_conv.1} parent=0 // loop_footer
    %s15 = sadd.s32 1, %s11
  $region7: #{gin_conv.1} parent=0 // loop_footer_branch
    %10 = sbr.rel target = $region3
  $region8: #{gin_conv.1} parent=0 // loop_exit
    _

</llo_original>
